<compile_context>
chip_gen: v7x
topology: tpu7x:2x2x1
jax: 0.10.0
libtpu: 0.0.40
codegen_flags: <defaults>
</compile_context>

<pallas_src>
import functools

import jax
import jax.numpy as jnp
from jax.experimental import pallas as pl
from jax.experimental.pallas import tpu as pltpu

_LANE = 128
_SUBLANE = 8
_MAX_ROWS_PER_TILE = 2048  # VMEM safety cap; irrelevant at demo sizes


def _round_up(x, m):
    return ((x + m - 1) // m) * m


def actor_sac_kernel(state_ref, w1_ref, b1_ref, w2_ref, b2_ref,
                     wh_ref, bh_ref, eps_ref, out_ref):
    """One batch tile: 3 matmuls (2 hidden + fused 256-lane head) + rsample/tanh."""
    pad_a = out_ref.shape[-1]          # 128-lane head width
    cd = w1_ref.dtype                  # matmul operand dtype (f32 or bf16)

    x = state_ref[...].astype(cd)

    # hidden layer 1: Linear + ReLU (f32 accumulation, f32 elementwise)
    h1 = jnp.dot(x, w1_ref[...], preferred_element_type=jnp.float32) + b1_ref[...]
    h1 = jnp.maximum(h1, 0.0).astype(cd)

    # hidden layer 2: Linear + ReLU
    h2 = jnp.dot(h1, w2_ref[...], preferred_element_type=jnp.float32) + b2_ref[...]
    h2 = jnp.maximum(h2, 0.0).astype(cd)

    # fused output head: one (h2, 2*pad_a) matmul, then vreg-aligned split
    y = jnp.dot(h2, wh_ref[...], preferred_element_type=jnp.float32) + bh_ref[...]
    mean = y[:, :pad_a]
    log_std = jnp.clip(y[:, pad_a:], -20.0, 2.0)
    std = jnp.exp(log_std)

    # reparameterized sample + tanh squash; lane-dense (TB, 128) store
    z = mean + std * eps_ref[...]
    out_ref[...] = jnp.tanh(z).astype(out_ref.dtype)


def prepare_params(params, action_dim, compute_dtype=jnp.float32):
    """One-time weight prep: split final layer into lane-padded mean/log_std
    heads, concatenate them into a single lane-aligned slab, cast matmul
    operands. Do this ONCE, not per forward call."""
    w1, b1, w2, b2, w3, b3 = params
    b1 = jnp.asarray(b1).reshape(1, -1)
    b2 = jnp.asarray(b2).reshape(1, -1)
    b3 = jnp.asarray(b3).reshape(1, -1)

    pad_a = max(_LANE, _round_up(action_dim, _LANE))

    def pad_cols(x, width):
        return jnp.pad(x, ((0, 0), (0, width - x.shape[1])))

    wm = pad_cols(w3[:, :action_dim], pad_a)
    ws = pad_cols(w3[:, action_dim:], pad_a)
    bm = pad_cols(b3[:, :action_dim], pad_a)
    bs = pad_cols(b3[:, action_dim:], pad_a)

    wh = jnp.concatenate([wm, ws], axis=1).astype(compute_dtype)   # (h2, 2*pad_a)
    bh = jnp.concatenate([bm, bs], axis=1)                         # (1, 2*pad_a), f32

    return (w1.astype(compute_dtype), b1.astype(jnp.float32),
            w2.astype(compute_dtype), b2.astype(jnp.float32),
            wh, bh.astype(jnp.float32))


def _auto_num_tiles():
    """1 grid step on single-TensorCore chips (v5e/v6e), 2 on v7x (2 TCs)."""
    try:
        kind = jax.devices()[0].device_kind.lower()
    except Exception:
        return 1
    return 2 if "v7" in kind else 1


@functools.partial(jax.jit, static_argnames=("action_dim", "num_tiles"))
def _actor_sac_jit(state, eps, prepared, *, action_dim, num_tiles):
    w1c, b1, w2c, b2, whc, bh = prepared
    B, state_dim = state.shape
    h1_dim = w1c.shape[1]
    h2_dim = w2c.shape[1]
    pad_a = whc.shape[1] // 2

    # batch tiling: num_tiles grid steps, each a sublane-multiple of rows
    tb = _round_up(pl.cdiv(B, num_tiles), _SUBLANE)
    b_pad = tb * num_tiles

    if state.shape[0] != b_pad:
        state = jnp.pad(state, ((0, b_pad - B), (0, 0)))
    if eps.shape != (b_pad, pad_a):
        eps = jnp.pad(eps, ((0, b_pad - eps.shape[0]), (0, pad_a - eps.shape[1])))

    out = pl.pallas_call(
        actor_sac_kernel,
        out_shape=jax.ShapeDtypeStruct((b_pad, pad_a), jnp.float32),
        grid_spec=pltpu.PrefetchScalarGridSpec(
            num_scalar_prefetch=0,
            grid=(num_tiles,),
            in_specs=[
                pl.BlockSpec((tb, state_dim), lambda i: (i, 0)),        # state tile
                pl.BlockSpec((state_dim, h1_dim), lambda i: (0, 0)),    # w1 (resident)
                pl.BlockSpec((1, h1_dim), lambda i: (0, 0)),            # b1
                pl.BlockSpec((h1_dim, h2_dim), lambda i: (0, 0)),       # w2
                pl.BlockSpec((1, h2_dim), lambda i: (0, 0)),            # b2
                pl.BlockSpec((h2_dim, 2 * pad_a), lambda i: (0, 0)),    # fused head W
                pl.BlockSpec((1, 2 * pad_a), lambda i: (0, 0)),         # fused head b
                pl.BlockSpec((tb, pad_a), lambda i: (i, 0)),            # eps tile
            ],
            out_specs=pl.BlockSpec((tb, pad_a), lambda i: (i, 0)),
        ),
        compiler_params=pltpu.CompilerParams(
            dimension_semantics=("parallel",)),  # shards batch across v7x's 2 TCs
    )(state, w1c, b1, w2c, b2, whc, bh, eps)

    return out[:B, :action_dim]


def actor_sac_forward(state, prepared, eps, action_dim, *, num_tiles=None):
    """Jitted forward. `prepared` comes from prepare_params (done once)."""
    if num_tiles is None:
        num_tiles = _auto_num_tiles()
    # VMEM safety cap for very large batches (no effect at demo sizes).
    while _round_up(pl.cdiv(state.shape[0], num_tiles), _SUBLANE) > _MAX_ROWS_PER_TILE:
        num_tiles *= 2
    return _actor_sac_jit(state, eps, prepared,
                          action_dim=action_dim, num_tiles=num_tiles)


def init_params(key, state_dim, dims, action_dim):
    """Deterministic synthetic parameters (Kaiming-ish scaled normals)."""
    sizes = [state_dim, *dims, action_dim * 2]
    params = []
    for i in range(len(sizes) - 1):
        key, kw = jax.random.split(key)
        fan_in, fan_out = sizes[i], sizes[i + 1]
        w = jax.random.normal(kw, (fan_in, fan_out), jnp.float32) * (1.0 / jnp.sqrt(fan_in))
        b = jnp.zeros((1, fan_out), jnp.float32)
        params.extend([w, b])
    return tuple(params)


if __name__ == "__main__":
    # Shapes consistent with the module's forward; batch big enough to exercise
    # the (optional) multi-tile batch grid while staying tiny (<100 KB inputs).
    batch = 512
    state_dim = 32
    dims = [64, 64]
    action_dim = 8

    key = jax.random.PRNGKey(0)
    k_params, k_state, k_eps = jax.random.split(key, 3)

    params = init_params(k_params, state_dim, dims, action_dim)
    state = jax.random.normal(k_state, (batch, state_dim), jnp.float32)
    eps = jax.random.normal(k_eps, (batch, action_dim), jnp.float32)  # rsample noise

    # Pure-JAX reference of the same math.
    def ref(state, params, eps):
        w1, b1, w2, b2, w3, b3 = params
        h1 = jnp.maximum(state @ w1 + b1, 0.0)
        h2 = jnp.maximum(h1 @ w2 + b2, 0.0)
        y = h2 @ w3 + b3
        mean, log_std = y[:, :action_dim], jnp.clip(y[:, action_dim:], -20.0, 2.0)
        return jnp.tanh(mean + jnp.exp(log_std) * eps)

    expected = ref(state, params, eps)

    # One-time weight prep (hoisted out of the per-call path).
    prepared = prepare_params(params, action_dim)  # f32 operands (default)

    # Auto tile count (1 on v5e/v6e, 2 on v7x).
    action = jax.block_until_ready(actor_sac_forward(state, prepared, eps, action_dim))
    assert action.shape == (batch, action_dim)
    assert jnp.allclose(action, expected, atol=1e-5, rtol=1e-5)

    # Explicit 2-tile grid (the v7x configuration) — correct on any chip.
    action_2t = jax.block_until_ready(
        actor_sac_forward(state, prepared, eps, action_dim, num_tiles=2))
    assert jnp.allclose(action_2t, expected, atol=1e-5, rtol=1e-5)

    # bf16 matmul-operand path (f32 accumulation & f32 elementwise) — looser
    # tolerance vs. the f32 reference. Kept optional; default stays f32.
    prepared_bf16 = prepare_params(params, action_dim, compute_dtype=jnp.bfloat16)
    action_bf16 = jax.block_until_ready(
        actor_sac_forward(state, prepared_bf16, eps, action_dim))
    assert action_bf16.shape == (batch, action_dim)
    assert bool(jnp.all(jnp.isfinite(action_bf16)))
    assert jnp.allclose(action_bf16, expected, atol=5e-2, rtol=5e-2)

    # Ragged / small batch exercises the jit-fused row-padding path.
    small = jax.block_until_ready(
        actor_sac_forward(state[:9], prepared, eps[:9], action_dim))
    assert jnp.allclose(small, expected[:9], atol=1e-5, rtol=1e-5)

    print("KERNEL_OK")
</pallas_src>

<mosaic_0001>
module attributes {stable_mosaic.version = 11 : i64} {
  func.func @actor_sac_kernel(%arg0: i32, %arg1: memref<512x32xf32, #tpu.memory_space<vmem>>, %arg2: memref<32x64xf32, #tpu.memory_space<vmem>>, %arg3: memref<1x64xf32, #tpu.memory_space<vmem>>, %arg4: memref<64x64xf32, #tpu.memory_space<vmem>>, %arg5: memref<1x64xf32, #tpu.memory_space<vmem>>, %arg6: memref<64x256xf32, #tpu.memory_space<vmem>>, %arg7: memref<1x256xf32, #tpu.memory_space<vmem>>, %arg8: memref<512x128xf32, #tpu.memory_space<vmem>>, %arg9: memref<512x128xf32, #tpu.memory_space<vmem>>) attributes {dimension_semantics = [#tpu.dimension_semantics<parallel>], iteration_bounds = array<i64: 1>, scalar_prefetch = 0 : i64, scratch_operands = 0 : i64, tpu.core_type = #tpu.core_type<tc>, window_params = [{transform_indices = @transform_0, window_bounds = array<i64: 512, 32>}, {pipeline_mode = #tpu.pipeline_mode<synchronous>, transform_indices = @transform_1, window_bounds = array<i64: 32, 64>}, {pipeline_mode = #tpu.pipeline_mode<synchronous>, transform_indices = @transform_2, window_bounds = array<i64: 1, 64>}, {pipeline_mode = #tpu.pipeline_mode<synchronous>, transform_indices = @transform_3, window_bounds = array<i64: 64, 64>}, {pipeline_mode = #tpu.pipeline_mode<synchronous>, transform_indices = @transform_4, window_bounds = array<i64: 1, 64>}, {pipeline_mode = #tpu.pipeline_mode<synchronous>, transform_indices = @transform_5, window_bounds = array<i64: 64, 256>}, {pipeline_mode = #tpu.pipeline_mode<synchronous>, transform_indices = @transform_6, window_bounds = array<i64: 1, 256>}, {transform_indices = @transform_7, window_bounds = array<i64: 512, 128>}, {transform_indices = @transform_8, window_bounds = array<i64: 512, 128>}]} {
    %c0 = arith.constant 0 : index
    %c0_0 = arith.constant 0 : index
    %0 = vector.load %arg1[%c0, %c0_0] : memref<512x32xf32, #tpu.memory_space<vmem>>, vector<512x32xf32>
    %c0_1 = arith.constant 0 : index
    %c0_2 = arith.constant 0 : index
    %1 = vector.load %arg2[%c0_1, %c0_2] : memref<32x64xf32, #tpu.memory_space<vmem>>, vector<32x64xf32>
    %cst = arith.constant dense<0.000000e+00> : vector<512x64xf32>
    %2 = tpu.matmul %0, %1, %cst {dimension_numbers = #tpu.dot_dimension_numbers<[1], [0], [0], [1], [0, 0, 1, 1], [], []>} : vector<512x32xf32>, vector<32x64xf32>, vector<512x64xf32> -> vector<512x64xf32>
    %c0_3 = arith.constant 0 : index
    %c0_4 = arith.constant 0 : index
    %3 = vector.load %arg3[%c0_3, %c0_4] : memref<1x64xf32, #tpu.memory_space<vmem>>, vector<1x64xf32>
    %4 = vector.broadcast %3 : vector<1x64xf32> to vector<512x64xf32>
    %5 = arith.addf %2, %4 : vector<512x64xf32>
    %cst_5 = arith.constant 0.000000e+00 : f32
    %6 = vector.broadcast %cst_5 : f32 to vector<512x64xf32>
    %7 = arith.maximumf %5, %6 : vector<512x64xf32>
    %c0_6 = arith.constant 0 : index
    %c0_7 = arith.constant 0 : index
    %8 = vector.load %arg4[%c0_6, %c0_7] : memref<64x64xf32, #tpu.memory_space<vmem>>, vector<64x64xf32>
    %cst_8 = arith.constant dense<0.000000e+00> : vector<512x64xf32>
    %9 = tpu.matmul %7, %8, %cst_8 {dimension_numbers = #tpu.dot_dimension_numbers<[1], [0], [0], [1], [0, 0, 1, 1], [], []>} : vector<512x64xf32>, vector<64x64xf32>, vector<512x64xf32> -> vector<512x64xf32>
    %c0_9 = arith.constant 0 : index
    %c0_10 = arith.constant 0 : index
    %10 = vector.load %arg5[%c0_9, %c0_10] : memref<1x64xf32, #tpu.memory_space<vmem>>, vector<1x64xf32>
    %11 = vector.broadcast %10 : vector<1x64xf32> to vector<512x64xf32>
    %12 = arith.addf %9, %11 : vector<512x64xf32>
    %cst_11 = arith.constant 0.000000e+00 : f32
    %13 = vector.broadcast %cst_11 : f32 to vector<512x64xf32>
    %14 = arith.maximumf %12, %13 : vector<512x64xf32>
    %c0_12 = arith.constant 0 : index
    %c0_13 = arith.constant 0 : index
    %15 = vector.load %arg6[%c0_12, %c0_13] : memref<64x256xf32, #tpu.memory_space<vmem>>, vector<64x256xf32>
    %cst_14 = arith.constant dense<0.000000e+00> : vector<512x256xf32>
    %16 = tpu.matmul %14, %15, %cst_14 {dimension_numbers = #tpu.dot_dimension_numbers<[1], [0], [0], [1], [0, 0, 1, 1], [], []>} : vector<512x64xf32>, vector<64x256xf32>, vector<512x256xf32> -> vector<512x256xf32>
    %c0_15 = arith.constant 0 : index
    %c0_16 = arith.constant 0 : index
    %17 = vector.load %arg7[%c0_15, %c0_16] : memref<1x256xf32, #tpu.memory_space<vmem>>, vector<1x256xf32>
    %18 = vector.broadcast %17 : vector<1x256xf32> to vector<512x256xf32>
    %19 = arith.addf %16, %18 : vector<512x256xf32>
    %20 = vector.extract_strided_slice %19 {offsets = [0, 0], sizes = [512, 128], strides = [1, 1]} : vector<512x256xf32> to vector<512x128xf32>
    %21 = vector.extract_strided_slice %19 {offsets = [0, 128], sizes = [512, 128], strides = [1, 1]} : vector<512x256xf32> to vector<512x128xf32>
    %cst_17 = arith.constant -2.000000e+01 : f32
    %cst_18 = arith.constant 2.000000e+00 : f32
    %22 = vector.broadcast %cst_17 : f32 to vector<512x128xf32>
    %23 = arith.maximumf %22, %21 : vector<512x128xf32>
    %24 = vector.broadcast %cst_18 : f32 to vector<512x128xf32>
    %25 = arith.minimumf %24, %23 : vector<512x128xf32>
    %26 = math.exp %25 : vector<512x128xf32>
    %c0_19 = arith.constant 0 : index
    %c0_20 = arith.constant 0 : index
    %27 = vector.load %arg8[%c0_19, %c0_20] : memref<512x128xf32, #tpu.memory_space<vmem>>, vector<512x128xf32>
    %28 = arith.mulf %26, %27 : vector<512x128xf32>
    %29 = arith.addf %20, %28 : vector<512x128xf32>
    %30 = math.tanh %29 : vector<512x128xf32>
    %c0_21 = arith.constant 0 : index
    %c0_22 = arith.constant 0 : index
    %31 = vector.load %arg9[%c0_21, %c0_22] : memref<512x128xf32, #tpu.memory_space<vmem>>, vector<512x128xf32>
    tpu.vector_store %arg9[%c0_21, %c0_22], %30 {strides = array<i32>} : memref<512x128xf32, #tpu.memory_space<vmem>>, vector<512x128xf32>,
    return
  }
  func.func @transform_0(%arg0: i32) -> (i32, i32) {
    %c0_i32 = arith.constant 0 : i32
    %c0_i32_0 = arith.constant 0 : i32
    return %arg0, %c0_i32 : i32, i32
  }
  func.func @transform_1(%arg0: i32) -> (i32, i32) {
    %c0_i32 = arith.constant 0 : i32
    %c0_i32_0 = arith.constant 0 : i32
    %c0_i32_1 = arith.constant 0 : i32
    return %c0_i32, %c0_i32_0 : i32, i32
  }
  func.func @transform_2(%arg0: i32) -> (i32, i32) {
    %c0_i32 = arith.constant 0 : i32
    %c0_i32_0 = arith.constant 0 : i32
    %c0_i32_1 = arith.constant 0 : i32
    return %c0_i32, %c0_i32_0 : i32, i32
  }
  func.func @transform_3(%arg0: i32) -> (i32, i32) {
    %c0_i32 = arith.constant 0 : i32
    %c0_i32_0 = arith.constant 0 : i32
    %c0_i32_1 = arith.constant 0 : i32
    return %c0_i32, %c0_i32_0 : i32, i32
  }
  func.func @transform_4(%arg0: i32) -> (i32, i32) {
    %c0_i32 = arith.constant 0 : i32
    %c0_i32_0 = arith.constant 0 : i32
    %c0_i32_1 = arith.constant 0 : i32
    return %c0_i32, %c0_i32_0 : i32, i32
  }
  func.func @transform_5(%arg0: i32) -> (i32, i32) {
    %c0_i32 = arith.constant 0 : i32
    %c0_i32_0 = arith.constant 0 : i32
    %c0_i32_1 = arith.constant 0 : i32
    return %c0_i32, %c0_i32_0 : i32, i32
  }
  func.func @transform_6(%arg0: i32) -> (i32, i32) {
    %c0_i32 = arith.constant 0 : i32
    %c0_i32_0 = arith.constant 0 : i32
    %c0_i32_1 = arith.constant 0 : i32
    return %c0_i32, %c0_i32_0 : i32, i32
  }
  func.func @transform_7(%arg0: i32) -> (i32, i32) {
    %c0_i32 = arith.constant 0 : i32
    %c0_i32_0 = arith.constant 0 : i32
    return %arg0, %c0_i32 : i32, i32
  }
  func.func @transform_8(%arg0: i32) -> (i32, i32) {
    %c0_i32 = arith.constant 0 : i32
    %c0_i32_0 = arith.constant 0 : i32
    return %arg0, %c0_i32 : i32, i32
  }
}

</mosaic_0001>

<llo_original>
// kernel: _actor_sac_jit.1
$region0: #{_actor_sac_jit.1}
  #allocation0 [shape = 'u32[]', space=smem, size = 0x4, offset = 0x4, fixed_abs, tag = 'smem constant byte address 0x4 - core index']
  #allocation1 [shape = 'u32[144,128]{1,0:T(1,128)}', space=vmem, size = 0x12000, scoped, tag = 'internal scratch']
  %s0 = inlined_call_operand.vmem [shape: f32[512,32], index: 0, kind: input, shape index: {}]
  %s1 = inlined_call_operand.vmem [shape: f32[32,64], index: 1, kind: input, shape index: {}]
  %s2 = inlined_call_operand.vmem [shape: f32[1,64], index: 2, kind: input, shape index: {}]
  %s3 = inlined_call_operand.vmem [shape: f32[64,64], index: 3, kind: input, shape index: {}]
  %s4 = inlined_call_operand.vmem [shape: f32[1,64], index: 4, kind: input, shape index: {}]
  %s5 = inlined_call_operand.vmem [shape: f32[64,256], index: 5, kind: input, shape index: {}]
  %s6 = inlined_call_operand.vmem [shape: f32[1,256], index: 6, kind: input, shape index: {}]
  %s7 = inlined_call_operand.vmem [shape: f32[512,128], index: 7, kind: input, shape index: {}]
  %s8 = inlined_call_operand.vmem [shape: f32[512,128], index: 8, kind: output, shape index: {}]
  %s9 = sld [smem:[#allocation0]]
  $region42: #{_actor_sac_jit.1} parent=0
    _
  %s11 = ssub.s32 1, %s9
  %s12 = scalar_select 0, %s11, %s9
  // Predicated region
  $region2: #{_actor_sac_jit.1} parent=0 // pred_check
    _
  $region3: #{_actor_sac_jit.1} parent=0 // pred_check_branch
    %14 = sbr.rel (0) target = $region5
  $region4: #{_actor_sac_jit.1} parent=0 // pred_region
    _
  $region5: #{_actor_sac_jit.1} parent=0 // pred_fallthru
    _
  // Predicated region
  $region6: #{_actor_sac_jit.1} parent=0 // pred_check
    _
  $region7: #{_actor_sac_jit.1} parent=0 // pred_check_branch
    %16 = sbr.rel (0) target = $region9
  $region8: #{_actor_sac_jit.1} parent=0 // pred_region
    _
  $region9: #{_actor_sac_jit.1} parent=0 // pred_fallthru
    _
  // Predicated region
  $region10: #{_actor_sac_jit.1} parent=0 // pred_check
    _
  $region11: #{_actor_sac_jit.1} parent=0 // pred_check_branch
    %18 = sbr.rel (0) target = $region13
  $region12: #{_actor_sac_jit.1} parent=0 // pred_region
    _
  $region13: #{_actor_sac_jit.1} parent=0 // pred_fallthru
    _
  // Predicated region
  $region14: #{_actor_sac_jit.1} parent=0 // pred_check
    _
  $region15: #{_actor_sac_jit.1} parent=0 // pred_check_branch
    %20 = sbr.rel (0) target = $region17
  $region16: #{_actor_sac_jit.1} parent=0 // pred_region
    _
  $region17: #{_actor_sac_jit.1} parent=0 // pred_fallthru
    _
  // Predicated region
  $region18: #{_actor_sac_jit.1} parent=0 // pred_check
    _
  $region19: #{_actor_sac_jit.1} parent=0 // pred_check_branch
    %22 = sbr.rel (0) target = $region21
  $region20: #{_actor_sac_jit.1} parent=0 // pred_region
    _
  $region21: #{_actor_sac_jit.1} parent=0 // pred_fallthru
    _
  // Predicated region
  $region22: #{_actor_sac_jit.1} parent=0 // pred_check
    _
  $region23: #{_actor_sac_jit.1} parent=0 // pred_check_branch
    %24 = sbr.rel (0) target = $region25
  $region24: #{_actor_sac_jit.1} parent=0 // pred_region
    _
  $region25: #{_actor_sac_jit.1} parent=0 // pred_fallthru
    _
  // Predicated region
  $region26: #{_actor_sac_jit.1} parent=0 // pred_check
    _
  $region27: #{_actor_sac_jit.1} parent=0 // pred_check_branch
    %26 = sbr.rel (0) target = $region29
  $region28: #{_actor_sac_jit.1} parent=0 // pred_region
    _
  $region29: #{_actor_sac_jit.1} parent=0 // pred_fallthru
    _
  // Predicated region
  $region30: #{_actor_sac_jit.1} parent=0 // pred_check
    _
  $region31: #{_actor_sac_jit.1} parent=0 // pred_check_branch
    %28 = sbr.rel (0) target = $region33
  $region32: #{_actor_sac_jit.1} parent=0 // pred_region
    _
  $region33: #{_actor_sac_jit.1} parent=0 // pred_fallthru
    _
  %v29 = vld [vmem:[%s0] sm:$0xff]
  %v30 = vld [vmem:[%s0 + $0x8] sm:$0xff]
  %v31 = vld [vmem:[%s0 + $0x10] sm:$0xff]
  %v32 = vld [vmem:[%s0 + $0x18] sm:$0xff]
  %v33 = vld [vmem:[%s0 + $0x20] sm:$0xff]
  %v34 = vld [vmem:[%s0 + $0x28] sm:$0xff]
  %v35 = vld [vmem:[%s0 + $0x30] sm:$0xff]
  %v36 = vld [vmem:[%s0 + $0x38] sm:$0xff]
  %v37 = vld [vmem:[%s0 + $0x40] sm:$0xff]
  %v38 = vld [vmem:[%s0 + $0x48] sm:$0xff]
  %v39 = vld [vmem:[%s0 + $0x50] sm:$0xff]
  %v40 = vld [vmem:[%s0 + $0x58] sm:$0xff]
  %v41 = vld [vmem:[%s0 + $0x60] sm:$0xff]
  %v42 = vld [vmem:[%s0 + $0x68] sm:$0xff]
  %v43 = vld [vmem:[%s0 + $0x70] sm:$0xff]
  %v44 = vld [vmem:[%s0 + $0x78] sm:$0xff]
  %v45 = vld [vmem:[%s0 + $0x80] sm:$0xff]
  %v46 = vld [vmem:[%s0 + $0x88] sm:$0xff]
  %v47 = vld [vmem:[%s0 + $0x90] sm:$0xff]
  %v48 = vld [vmem:[%s0 + $0x98] sm:$0xff]
  %v49 = vld [vmem:[%s0 + $0xa0] sm:$0xff]
  %v50 = vld [vmem:[%s0 + $0xa8] sm:$0xff]
  %v51 = vld [vmem:[%s0 + $0xb0] sm:$0xff]
  %v52 = vld [vmem:[%s0 + $0xb8] sm:$0xff]
  %v53 = vld [vmem:[%s0 + $0xc0] sm:$0xff]
  %v54 = vld [vmem:[%s0 + $0xc8] sm:$0xff]
  %v55 = vld [vmem:[%s0 + $0xd0] sm:$0xff]
  %v56 = vld [vmem:[%s0 + $0xd8] sm:$0xff]
  %v57 = vld [vmem:[%s0 + $0xe0] sm:$0xff]
  %v58 = vld [vmem:[%s0 + $0xe8] sm:$0xff]
  %v59 = vld [vmem:[%s0 + $0xf0] sm:$0xff]
  %v60 = vld [vmem:[%s0 + $0xf8] sm:$0xff]
  %v61 = vld [vmem:[%s0 + $0x100] sm:$0xff]
  %v62 = vld [vmem:[%s0 + $0x108] sm:$0xff]
  %v63 = vld [vmem:[%s0 + $0x110] sm:$0xff]
  %v64 = vld [vmem:[%s0 + $0x118] sm:$0xff]
  %v65 = vld [vmem:[%s0 + $0x120] sm:$0xff]
  %v66 = vld [vmem:[%s0 + $0x128] sm:$0xff]
  %v67 = vld [vmem:[%s0 + $0x130] sm:$0xff]
  %v68 = vld [vmem:[%s0 + $0x138] sm:$0xff]
  %v69 = vld [vmem:[%s0 + $0x140] sm:$0xff]
  %v70 = vld [vmem:[%s0 + $0x148] sm:$0xff]
  %v71 = vld [vmem:[%s0 + $0x150] sm:$0xff]
  %v72 = vld [vmem:[%s0 + $0x158] sm:$0xff]
  %v73 = vld [vmem:[%s0 + $0x160] sm:$0xff]
  %v74 = vld [vmem:[%s0 + $0x168] sm:$0xff]
  %v75 = vld [vmem:[%s0 + $0x170] sm:$0xff]
  %v76 = vld [vmem:[%s0 + $0x178] sm:$0xff]
  %v77 = vld [vmem:[%s0 + $0x180] sm:$0xff]
  %v78 = vld [vmem:[%s0 + $0x188] sm:$0xff]
  %v79 = vld [vmem:[%s0 + $0x190] sm:$0xff]
  %v80 = vld [vmem:[%s0 + $0x198] sm:$0xff]
  %v81 = vld [vmem:[%s0 + $0x1a0] sm:$0xff]
  %v82 = vld [vmem:[%s0 + $0x1a8] sm:$0xff]
  %v83 = vld [vmem:[%s0 + $0x1b0] sm:$0xff]
  %v84 = vld [vmem:[%s0 + $0x1b8] sm:$0xff]
  %v85 = vld [vmem:[%s0 + $0x1c0] sm:$0xff]
  %v86 = vld [vmem:[%s0 + $0x1c8] sm:$0xff]
  %v87 = vld [vmem:[%s0 + $0x1d0] sm:$0xff]
  %v88 = vld [vmem:[%s0 + $0x1d8] sm:$0xff]
  %v89 = vld [vmem:[%s0 + $0x1e0] sm:$0xff]
  %v90 = vld [vmem:[%s0 + $0x1e8] sm:$0xff]
  %v91 = vld [vmem:[%s0 + $0x1f0] sm:$0xff]
  %v92 = vld [vmem:[%s0 + $0x1f8] sm:$0xff]
  %v93 = vld [vmem:[%s1] sm:$0xff]
  %v94 = vld [vmem:[%s1 + $0x8] sm:$0xff]
  %v95 = vld [vmem:[%s1 + $0x10] sm:$0xff]
  %v96 = vld [vmem:[%s1 + $0x18] sm:$0xff]
  %v97 = vld [vmem:[%s2] sm:$0x1]
  %v99 = vlaneseq
  %v100 = vshrl.u32 %v99, 7
  %v101 = vsub.s32 0, %v100
  %v102 = vrot.slane %v97, %v101
  %vm104 = vcmask 261120
  %v106 = vsel %vm104, %v29, 0
  %v109 = vsel %vm104, %v30, 0
  %v112 = vsel %vm104, %v31, 0
  %v115 = vsel %vm104, %v32, 0
  %v118 = vsel %vm104, %v33, 0
  %v121 = vsel %vm104, %v34, 0
  %v124 = vsel %vm104, %v35, 0
  %v127 = vsel %vm104, %v36, 0
  %v130 = vsel %vm104, %v37, 0
  %v133 = vsel %vm104, %v38, 0
  %v136 = vsel %vm104, %v39, 0
  %v139 = vsel %vm104, %v40, 0
  %v142 = vsel %vm104, %v41, 0
  %v145 = vsel %vm104, %v42, 0
  %v148 = vsel %vm104, %v43, 0
  %v151 = vsel %vm104, %v44, 0
  %v154 = vsel %vm104, %v45, 0
  %v157 = vsel %vm104, %v46, 0
  %v160 = vsel %vm104, %v47, 0
  %v163 = vsel %vm104, %v48, 0
  %v166 = vsel %vm104, %v49, 0
  %v169 = vsel %vm104, %v50, 0
  %v172 = vsel %vm104, %v51, 0
  %v175 = vsel %vm104, %v52, 0
  %v178 = vsel %vm104, %v53, 0
  %v181 = vsel %vm104, %v54, 0
  %v184 = vsel %vm104, %v55, 0
  %v187 = vsel %vm104, %v56, 0
  %v190 = vsel %vm104, %v57, 0
  %v193 = vsel %vm104, %v58, 0
  %v196 = vsel %vm104, %v59, 0
  %v199 = vsel %vm104, %v60, 0
  %v202 = vsel %vm104, %v61, 0
  %v205 = vsel %vm104, %v62, 0
  %v208 = vsel %vm104, %v63, 0
  %v211 = vsel %vm104, %v64, 0
  %v214 = vsel %vm104, %v65, 0
  %v217 = vsel %vm104, %v66, 0
  %v220 = vsel %vm104, %v67, 0
  %v223 = vsel %vm104, %v68, 0
  %v226 = vsel %vm104, %v69, 0
  %v229 = vsel %vm104, %v70, 0
  %v232 = vsel %vm104, %v71, 0
  %v235 = vsel %vm104, %v72, 0
  %v238 = vsel %vm104, %v73, 0
  %v241 = vsel %vm104, %v74, 0
  %v244 = vsel %vm104, %v75, 0
  %v247 = vsel %vm104, %v76, 0
  %v250 = vsel %vm104, %v77, 0
  %v253 = vsel %vm104, %v78, 0
  %v256 = vsel %vm104, %v79, 0
  %v259 = vsel %vm104, %v80, 0
  %v262 = vsel %vm104, %v81, 0
  %v265 = vsel %vm104, %v82, 0
  %v268 = vsel %vm104, %v83, 0
  %v271 = vsel %vm104, %v84, 0
  %v274 = vsel %vm104, %v85, 0
  %v277 = vsel %vm104, %v86, 0
  %v280 = vsel %vm104, %v87, 0
  %v283 = vsel %vm104, %v88, 0
  %v286 = vsel %vm104, %v89, 0
  %v289 = vsel %vm104, %v90, 0
  %v292 = vsel %vm104, %v91, 0
  %v295 = vsel %vm104, %v92, 0
  %297 = vmatprep.subr.mxu0 0.0
  %298 = vmatpush1.msra.mxu0 %v93
  %299 = vmatprep.subr.mxu0 0.0
  %300 = vmatpush1.msra.mxu0 %v94
  %301 = vmatprep.subr.mxu0 0.0
  %302 = vmatpush1.msra.mxu0 %v95
  %303 = vmatprep.subr.mxu0 0.0
  %304 = vmatpush1.msra.mxu0 %v96
  %305 = vmatprep.subr.mxu0 0.0
  %306 = vmatpush1.msra.mxu0 0.0
  %307 = vmatprep.subr.mxu0 0.0
  %308 = vmatpush1.msra.mxu0 0.0
  %309 = vmatprep.subr.mxu0 0.0
  %310 = vmatpush1.msra.mxu0 0.0
  %311 = vmatprep.subr.mxu0 0.0
  %312 = vmatpush1.msra.mxu0 0.0
  %313 = vmatprep.subr.mxu0 0.0
  %314 = vmatpush1.msra.mxu0 0.0
  %315 = vmatprep.subr.mxu0 0.0
  %316 = vmatpush1.msra.mxu0 0.0
  %317 = vmatprep.subr.mxu0 0.0
  %318 = vmatpush1.msra.mxu0 0.0
  %319 = vmatprep.subr.mxu0 0.0
  %320 = vmatpush1.msra.mxu0 0.0
  %321 = vmatprep.subr.mxu0 0.0
  %322 = vmatpush1.msra.mxu0 0.0
  %323 = vmatprep.subr.mxu0 0.0
  %324 = vmatpush1.msra.mxu0 0.0
  %325 = vmatprep.subr.mxu0 0.0
  %326 = vmatpush1.msra.mxu0 0.0
  %327 = vmatprep.subr.mxu0 0.0
  %328 = vmatpush1.msra.mxu0 0.0
  %329 = vmatprep.subr.mxu0 0.0
  %330 = vmatpush1.msra.mxu0 0.0
  %331 = vmatprep.subr.mxu0 0.0
  %332 = vmatpush1.msra.mxu0 0.0
  %333 = vmatprep.subr.mxu0 0.0
  %334 = vmatpush1.msra.mxu0 0.0
  %335 = vmatprep.subr.mxu0 0.0
  %336 = vmatpush1.msra.mxu0 0.0
  %337 = vmatprep.subr.mxu0 0.0
  %338 = vmatpush1.msra.mxu0 0.0
  %339 = vmatprep.subr.mxu0 0.0
  %340 = vmatpush1.msra.mxu0 0.0
  %341 = vmatprep.subr.mxu0 0.0
  %342 = vmatpush1.msra.mxu0 0.0
  %343 = vmatprep.subr.mxu0 0.0
  %344 = vmatpush1.msra.mxu0 0.0
  %345 = vmatprep.subr.mxu0 0.0
  %346 = vmatpush1.msra.mxu0 0.0
  %347 = vmatprep.subr.mxu0 0.0
  %348 = vmatpush1.msra.mxu0 0.0
  %349 = vmatprep.subr.mxu0 0.0
  %350 = vmatpush1.msra.mxu0 0.0
  %351 = vmatprep.subr.mxu0 0.0
  %352 = vmatpush1.msra.mxu0 0.0
  %353 = vmatprep.subr.mxu0 0.0
  %354 = vmatpush1.msra.mxu0 0.0
  %355 = vmatprep.subr.mxu0 0.0
  %356 = vmatpush1.msra.mxu0 0.0
  %357 = vmatprep.subr.mxu0 0.0
  %358 = vmatpush1.msra.mxu0 0.0
  %359 = vmatprep.subr.mxu0 0.0
  %360 = vmatpush1.msra.mxu0 0.0
  %361 = vmatprep.mubr.f32.mxu0 0.0
  %362 = vmatmul.mubr.f32.gmra.mrb[0].mxu0 %v106
  %v363 = vpop.f32.mrb[0].mxu0
  %v364 = vadd.f32 %v102, %v363
  %v365 = vpop.f32.mrb[0].mxu0
  %366 = vmatprep.mubr.f32.mxu0 0.0
  %367 = vmatmul.mubr.f32.gmra.mrb[0].mxu0 %v109
  %v368 = vpop.f32.mrb[0].mxu0
  %v369 = vadd.f32 %v102, %v368
  %v370 = vpop.f32.mrb[0].mxu0
  %371 = vmatprep.mubr.f32.mxu0 0.0
  %372 = vmatmul.mubr.f32.gmra.mrb[0].mxu0 %v112
  %v373 = vpop.f32.mrb[0].mxu0
  %v374 = vadd.f32 %v102, %v373
  %v375 = vpop.f32.mrb[0].mxu0
  %376 = vmatprep.mubr.f32.mxu0 0.0
  %377 = vmatmul.mubr.f32.gmra.mrb[0].mxu0 %v115
  %v378 = vpop.f32.mrb[0].mxu0
  %v379 = vadd.f32 %v102, %v378
  %v380 = vpop.f32.mrb[0].mxu0
  %381 = vmatprep.mubr.f32.mxu0 0.0
  %382 = vmatmul.mubr.f32.gmra.mrb[0].mxu0 %v118
  %v383 = vpop.f32.mrb[0].mxu0
  %v384 = vadd.f32 %v102, %v383
  %v385 = vpop.f32.mrb[0].mxu0
  %386 = vmatprep.mubr.f32.mxu0 0.0
  %387 = vmatmul.mubr.f32.gmra.mrb[0].mxu0 %v121
  %v388 = vpop.f32.mrb[0].mxu0
  %v389 = vadd.f32 %v102, %v388
  %v390 = vpop.f32.mrb[0].mxu0
  %391 = vmatprep.mubr.f32.mxu0 0.0
  %392 = vmatmul.mubr.f32.gmra.mrb[0].mxu0 %v124
  %v393 = vpop.f32.mrb[0].mxu0
  %v394 = vadd.f32 %v102, %v393
  %v395 = vpop.f32.mrb[0].mxu0
  %396 = vmatprep.mubr.f32.mxu0 0.0
  %397 = vmatmul.mubr.f32.gmra.mrb[0].mxu0 %v127
  %v398 = vpop.f32.mrb[0].mxu0
  %v399 = vadd.f32 %v102, %v398
  %v400 = vpop.f32.mrb[0].mxu0
  %401 = vmatprep.mubr.f32.mxu0 0.0
  %402 = vmatmul.mubr.f32.gmra.mrb[0].mxu0 %v130
  %v403 = vpop.f32.mrb[0].mxu0
  %v404 = vadd.f32 %v102, %v403
  %v405 = vpop.f32.mrb[0].mxu0
  %406 = vmatprep.mubr.f32.mxu0 0.0
  %407 = vmatmul.mubr.f32.gmra.mrb[0].mxu0 %v133
  %v408 = vpop.f32.mrb[0].mxu0
  %v409 = vadd.f32 %v102, %v408
  %v410 = vpop.f32.mrb[0].mxu0
  %411 = vmatprep.mubr.f32.mxu0 0.0
  %412 = vmatmul.mubr.f32.gmra.mrb[0].mxu0 %v136
  %v413 = vpop.f32.mrb[0].mxu0
  %v414 = vadd.f32 %v102, %v413
  %v415 = vpop.f32.mrb[0].mxu0
  %416 = vmatprep.mubr.f32.mxu0 0.0
  %417 = vmatmul.mubr.f32.gmra.mrb[0].mxu0 %v139
  %v418 = vpop.f32.mrb[0].mxu0
  %v419 = vadd.f32 %v102, %v418
  %v420 = vpop.f32.mrb[0].mxu0
  %421 = vmatprep.mubr.f32.mxu0 0.0
  %422 = vmatmul.mubr.f32.gmra.mrb[0].mxu0 %v142
  %v423 = vpop.f32.mrb[0].mxu0
  %v424 = vadd.f32 %v102, %v423
  %v425 = vpop.f32.mrb[0].mxu0
  %426 = vmatprep.mubr.f32.mxu0 0.0
  %427 = vmatmul.mubr.f32.gmra.mrb[0].mxu0 %v145
  %v428 = vpop.f32.mrb[0].mxu0
  %v429 = vadd.f32 %v102, %v428
  %v430 = vpop.f32.mrb[0].mxu0
  %431 = vmatprep.mubr.f32.mxu0 0.0
  %432 = vmatmul.mubr.f32.gmra.mrb[0].mxu0 %v148
  %v433 = vpop.f32.mrb[0].mxu0
  %v434 = vadd.f32 %v102, %v433
  %v435 = vpop.f32.mrb[0].mxu0
  %436 = vmatprep.mubr.f32.mxu0 0.0
  %437 = vmatmul.mubr.f32.gmra.mrb[0].mxu0 %v151
  %v438 = vpop.f32.mrb[0].mxu0
  %v439 = vadd.f32 %v102, %v438
  %v440 = vpop.f32.mrb[0].mxu0
  %441 = vmatprep.mubr.f32.mxu0 0.0
  %442 = vmatmul.mubr.f32.gmra.mrb[0].mxu0 %v154
  %v443 = vpop.f32.mrb[0].mxu0
  %v444 = vadd.f32 %v102, %v443
  %v445 = vpop.f32.mrb[0].mxu0
  %446 = vmatprep.mubr.f32.mxu0 0.0
  %447 = vmatmul.mubr.f32.gmra.mrb[0].mxu0 %v157
  %v448 = vpop.f32.mrb[0].mxu0
  %v449 = vadd.f32 %v102, %v448
  %v450 = vpop.f32.mrb[0].mxu0
  %451 = vmatprep.mubr.f32.mxu0 0.0
  %452 = vmatmul.mubr.f32.gmra.mrb[0].mxu0 %v160
  %v453 = vpop.f32.mrb[0].mxu0
  %v454 = vadd.f32 %v102, %v453
  %v455 = vpop.f32.mrb[0].mxu0
  %456 = vmatprep.mubr.f32.mxu0 0.0
  %457 = vmatmul.mubr.f32.gmra.mrb[0].mxu0 %v163
  %v458 = vpop.f32.mrb[0].mxu0
  %v459 = vadd.f32 %v102, %v458
  %v460 = vpop.f32.mrb[0].mxu0
  %461 = vmatprep.mubr.f32.mxu0 0.0
  %462 = vmatmul.mubr.f32.gmra.mrb[0].mxu0 %v166
  %v463 = vpop.f32.mrb[0].mxu0
  %v464 = vadd.f32 %v102, %v463
  %v465 = vpop.f32.mrb[0].mxu0
  %466 = vmatprep.mubr.f32.mxu0 0.0
  %467 = vmatmul.mubr.f32.gmra.mrb[0].mxu0 %v169
  %v468 = vpop.f32.mrb[0].mxu0
  %v469 = vadd.f32 %v102, %v468
  %v470 = vpop.f32.mrb[0].mxu0
  %471 = vmatprep.mubr.f32.mxu0 0.0
  %472 = vmatmul.mubr.f32.gmra.mrb[0].mxu0 %v172
  %v473 = vpop.f32.mrb[0].mxu0
  %v474 = vadd.f32 %v102, %v473
  %v475 = vpop.f32.mrb[0].mxu0
  %476 = vmatprep.mubr.f32.mxu0 0.0
  %477 = vmatmul.mubr.f32.gmra.mrb[0].mxu0 %v175
  %v478 = vpop.f32.mrb[0].mxu0
  %v479 = vadd.f32 %v102, %v478
  %v480 = vpop.f32.mrb[0].mxu0
  %481 = vmatprep.mubr.f32.mxu0 0.0
  %482 = vmatmul.mubr.f32.gmra.mrb[0].mxu0 %v178
  %v483 = vpop.f32.mrb[0].mxu0
  %v484 = vadd.f32 %v102, %v483
  %v485 = vpop.f32.mrb[0].mxu0
  %486 = vmatprep.mubr.f32.mxu0 0.0
  %487 = vmatmul.mubr.f32.gmra.mrb[0].mxu0 %v181
  %v488 = vpop.f32.mrb[0].mxu0
  %v489 = vadd.f32 %v102, %v488
  %v490 = vpop.f32.mrb[0].mxu0
  %491 = vmatprep.mubr.f32.mxu0 0.0
  %492 = vmatmul.mubr.f32.gmra.mrb[0].mxu0 %v184
  %v493 = vpop.f32.mrb[0].mxu0
  %v494 = vadd.f32 %v102, %v493
  %v495 = vpop.f32.mrb[0].mxu0
  %496 = vmatprep.mubr.f32.mxu0 0.0
  %497 = vmatmul.mubr.f32.gmra.mrb[0].mxu0 %v187
  %v498 = vpop.f32.mrb[0].mxu0
  %v499 = vadd.f32 %v102, %v498
  %v500 = vpop.f32.mrb[0].mxu0
  %501 = vmatprep.mubr.f32.mxu0 0.0
  %502 = vmatmul.mubr.f32.gmra.mrb[0].mxu0 %v190
  %v503 = vpop.f32.mrb[0].mxu0
  %v504 = vadd.f32 %v102, %v503
  %v505 = vpop.f32.mrb[0].mxu0
  %506 = vmatprep.mubr.f32.mxu0 0.0
  %507 = vmatmul.mubr.f32.gmra.mrb[0].mxu0 %v193
  %v508 = vpop.f32.mrb[0].mxu0
  %v509 = vadd.f32 %v102, %v508
  %v510 = vpop.f32.mrb[0].mxu0
  %511 = vmatprep.mubr.f32.mxu0 0.0
  %512 = vmatmul.mubr.f32.gmra.mrb[0].mxu0 %v196
  %v513 = vpop.f32.mrb[0].mxu0
  %v514 = vadd.f32 %v102, %v513
  %v515 = vpop.f32.mrb[0].mxu0
  %516 = vmatprep.mubr.f32.mxu0 0.0
  %517 = vmatmul.mubr.f32.gmra.mrb[0].mxu0 %v199
  %v518 = vpop.f32.mrb[0].mxu0
  %v519 = vadd.f32 %v102, %v518
  %v520 = vpop.f32.mrb[0].mxu0
  %521 = vmatprep.mubr.f32.mxu0 0.0
  %522 = vmatmul.mubr.f32.gmra.mrb[0].mxu0 %v202
  %v523 = vpop.f32.mrb[0].mxu0
  %v524 = vadd.f32 %v102, %v523
  %v525 = vpop.f32.mrb[0].mxu0
  %526 = vmatprep.mubr.f32.mxu0 0.0
  %527 = vmatmul.mubr.f32.gmra.mrb[0].mxu0 %v205
  %v528 = vpop.f32.mrb[0].mxu0
  %v529 = vadd.f32 %v102, %v528
  %v530 = vpop.f32.mrb[0].mxu0
  %531 = vmatprep.mubr.f32.mxu0 0.0
  %532 = vmatmul.mubr.f32.gmra.mrb[0].mxu0 %v208
  %v533 = vpop.f32.mrb[0].mxu0
  %v534 = vadd.f32 %v102, %v533
  %v535 = vpop.f32.mrb[0].mxu0
  %536 = vmatprep.mubr.f32.mxu0 0.0
  %537 = vmatmul.mubr.f32.gmra.mrb[0].mxu0 %v211
  %v538 = vpop.f32.mrb[0].mxu0
  %v539 = vadd.f32 %v102, %v538
  %v540 = vpop.f32.mrb[0].mxu0
  %541 = vmatprep.mubr.f32.mxu0 0.0
  %542 = vmatmul.mubr.f32.gmra.mrb[0].mxu0 %v214
  %v543 = vpop.f32.mrb[0].mxu0
  %v544 = vadd.f32 %v102, %v543
  %v545 = vpop.f32.mrb[0].mxu0
  %546 = vmatprep.mubr.f32.mxu0 0.0
  %547 = vmatmul.mubr.f32.gmra.mrb[0].mxu0 %v217
  %v548 = vpop.f32.mrb[0].mxu0
  %v549 = vadd.f32 %v102, %v548
  %v550 = vpop.f32.mrb[0].mxu0
  %551 = vmatprep.mubr.f32.mxu0 0.0
  %552 = vmatmul.mubr.f32.gmra.mrb[0].mxu0 %v220
  %v553 = vpop.f32.mrb[0].mxu0
  %v554 = vadd.f32 %v102, %v553
  %v555 = vpop.f32.mrb[0].mxu0
  %556 = vmatprep.mubr.f32.mxu0 0.0
  %557 = vmatmul.mubr.f32.gmra.mrb[0].mxu0 %v223
  %v558 = vpop.f32.mrb[0].mxu0
  %v559 = vadd.f32 %v102, %v558
  %v560 = vpop.f32.mrb[0].mxu0
  %561 = vmatprep.mubr.f32.mxu0 0.0
  %562 = vmatmul.mubr.f32.gmra.mrb[0].mxu0 %v226
  %v563 = vpop.f32.mrb[0].mxu0
  %v564 = vadd.f32 %v102, %v563
  %v565 = vpop.f32.mrb[0].mxu0
  %566 = vmatprep.mubr.f32.mxu0 0.0
  %567 = vmatmul.mubr.f32.gmra.mrb[0].mxu0 %v229
  %v568 = vpop.f32.mrb[0].mxu0
  %v569 = vadd.f32 %v102, %v568
  %v570 = vpop.f32.mrb[0].mxu0
  %571 = vmatprep.mubr.f32.mxu0 0.0
  %572 = vmatmul.mubr.f32.gmra.mrb[0].mxu0 %v232
  %v573 = vpop.f32.mrb[0].mxu0
  %v574 = vadd.f32 %v102, %v573
  %v575 = vpop.f32.mrb[0].mxu0
  %576 = vmatprep.mubr.f32.mxu0 0.0
  %577 = vmatmul.mubr.f32.gmra.mrb[0].mxu0 %v235
  %v578 = vpop.f32.mrb[0].mxu0
  %v579 = vadd.f32 %v102, %v578
  %v580 = vpop.f32.mrb[0].mxu0
  %581 = vmatprep.mubr.f32.mxu0 0.0
  %582 = vmatmul.mubr.f32.gmra.mrb[0].mxu0 %v238
  %v583 = vpop.f32.mrb[0].mxu0
  %v584 = vadd.f32 %v102, %v583
  %v585 = vpop.f32.mrb[0].mxu0
  %586 = vmatprep.mubr.f32.mxu0 0.0
  %587 = vmatmul.mubr.f32.gmra.mrb[0].mxu0 %v241
  %v588 = vpop.f32.mrb[0].mxu0
  %v589 = vadd.f32 %v102, %v588
  %v590 = vpop.f32.mrb[0].mxu0
  %591 = vmatprep.mubr.f32.mxu0 0.0
  %592 = vmatmul.mubr.f32.gmra.mrb[0].mxu0 %v244
  %v593 = vpop.f32.mrb[0].mxu0
  %v594 = vadd.f32 %v102, %v593
  %v595 = vpop.f32.mrb[0].mxu0
  %596 = vmatprep.mubr.f32.mxu0 0.0
  %597 = vmatmul.mubr.f32.gmra.mrb[0].mxu0 %v247
  %v598 = vpop.f32.mrb[0].mxu0
  %v599 = vadd.f32 %v102, %v598
  %v600 = vpop.f32.mrb[0].mxu0
  %601 = vmatprep.mubr.f32.mxu0 0.0
  %602 = vmatmul.mubr.f32.gmra.mrb[0].mxu0 %v250
  %v603 = vpop.f32.mrb[0].mxu0
  %v604 = vadd.f32 %v102, %v603
  %v605 = vpop.f32.mrb[0].mxu0
  %606 = vmatprep.mubr.f32.mxu0 0.0
  %607 = vmatmul.mubr.f32.gmra.mrb[0].mxu0 %v253
  %v608 = vpop.f32.mrb[0].mxu0
  %v609 = vadd.f32 %v102, %v608
  %v610 = vpop.f32.mrb[0].mxu0
  %611 = vmatprep.mubr.f32.mxu0 0.0
  %612 = vmatmul.mubr.f32.gmra.mrb[0].mxu0 %v256
  %v613 = vpop.f32.mrb[0].mxu0
  %v614 = vadd.f32 %v102, %v613
  %v615 = vpop.f32.mrb[0].mxu0
  %616 = vmatprep.mubr.f32.mxu0 0.0
  %617 = vmatmul.mubr.f32.gmra.mrb[0].mxu0 %v259
  %v618 = vpop.f32.mrb[0].mxu0
  %v619 = vadd.f32 %v102, %v618
  %v620 = vpop.f32.mrb[0].mxu0
  %621 = vmatprep.mubr.f32.mxu0 0.0
  %622 = vmatmul.mubr.f32.gmra.mrb[0].mxu0 %v262
  %v623 = vpop.f32.mrb[0].mxu0
  %v624 = vadd.f32 %v102, %v623
  %v625 = vpop.f32.mrb[0].mxu0
  %626 = vmatprep.mubr.f32.mxu0 0.0
  %627 = vmatmul.mubr.f32.gmra.mrb[0].mxu0 %v265
  %v628 = vpop.f32.mrb[0].mxu0
  %v629 = vadd.f32 %v102, %v628
  %v630 = vpop.f32.mrb[0].mxu0
  %631 = vmatprep.mubr.f32.mxu0 0.0
  %632 = vmatmul.mubr.f32.gmra.mrb[0].mxu0 %v268
  %v633 = vpop.f32.mrb[0].mxu0
  %v634 = vadd.f32 %v102, %v633
  %v635 = vpop.f32.mrb[0].mxu0
  %636 = vmatprep.mubr.f32.mxu0 0.0
  %637 = vmatmul.mubr.f32.gmra.mrb[0].mxu0 %v271
  %v638 = vpop.f32.mrb[0].mxu0
  %v639 = vadd.f32 %v102, %v638
  %v640 = vpop.f32.mrb[0].mxu0
  %641 = vmatprep.mubr.f32.mxu0 0.0
  %642 = vmatmul.mubr.f32.gmra.mrb[0].mxu0 %v274
  %v643 = vpop.f32.mrb[0].mxu0
  %v644 = vadd.f32 %v102, %v643
  %v645 = vpop.f32.mrb[0].mxu0
  %646 = vmatprep.mubr.f32.mxu0 0.0
  %647 = vmatmul.mubr.f32.gmra.mrb[0].mxu0 %v277
  %v648 = vpop.f32.mrb[0].mxu0
  %v649 = vadd.f32 %v102, %v648
  %v650 = vpop.f32.mrb[0].mxu0
  %651 = vmatprep.mubr.f32.mxu0 0.0
  %652 = vmatmul.mubr.f32.gmra.mrb[0].mxu0 %v280
  %v653 = vpop.f32.mrb[0].mxu0
  %v654 = vadd.f32 %v102, %v653
  %v655 = vpop.f32.mrb[0].mxu0
  %656 = vmatprep.mubr.f32.mxu0 0.0
  %657 = vmatmul.mubr.f32.gmra.mrb[0].mxu0 %v283
  %v658 = vpop.f32.mrb[0].mxu0
  %v659 = vadd.f32 %v102, %v658
  %v660 = vpop.f32.mrb[0].mxu0
  %661 = vmatprep.mubr.f32.mxu0 0.0
  %662 = vmatmul.mubr.f32.gmra.mrb[0].mxu0 %v286
  %v663 = vpop.f32.mrb[0].mxu0
  %v664 = vadd.f32 %v102, %v663
  %v665 = vpop.f32.mrb[0].mxu0
  %666 = vmatprep.mubr.f32.mxu0 0.0
  %667 = vmatmul.mubr.f32.gmra.mrb[0].mxu0 %v289
  %v668 = vpop.f32.mrb[0].mxu0
  %v669 = vadd.f32 %v102, %v668
  %v670 = vpop.f32.mrb[0].mxu0
  %671 = vmatprep.mubr.f32.mxu0 0.0
  %672 = vmatmul.mubr.f32.gmra.mrb[0].mxu0 %v292
  %v673 = vpop.f32.mrb[0].mxu0
  %v674 = vadd.f32 %v102, %v673
  %v675 = vpop.f32.mrb[0].mxu0
  %676 = vmatprep.mubr.f32.mxu0 0.0
  %677 = vmatmul.mubr.f32.gmra.mrb[0].mxu0 %v295
  %v678 = vpop.f32.mrb[0].mxu0
  %v679 = vadd.f32 %v102, %v678
  %v680 = vpop.f32.mrb[0].mxu0
  %681 = vdwg.mxu0
  %v682 = vmax.f32 %v364, 0.0
  %v683 = vmax.f32 %v369, 0.0
  %v684 = vmax.f32 %v374, 0.0
  %v685 = vmax.f32 %v379, 0.0
  %v686 = vmax.f32 %v384, 0.0
  %v687 = vmax.f32 %v389, 0.0
  %v688 = vmax.f32 %v394, 0.0
  %v689 = vmax.f32 %v399, 0.0
  %v690 = vmax.f32 %v404, 0.0
  %v691 = vmax.f32 %v409, 0.0
  %v692 = vmax.f32 %v414, 0.0
  %v693 = vmax.f32 %v419, 0.0
  %v694 = vmax.f32 %v424, 0.0
  %v695 = vmax.f32 %v429, 0.0
  %v696 = vmax.f32 %v434, 0.0
  %v697 = vmax.f32 %v439, 0.0
  %v698 = vmax.f32 %v444, 0.0
  %v699 = vmax.f32 %v449, 0.0
  %v700 = vmax.f32 %v454, 0.0
  %v701 = vmax.f32 %v459, 0.0
  %v702 = vmax.f32 %v464, 0.0
  %v703 = vmax.f32 %v469, 0.0
  %v704 = vmax.f32 %v474, 0.0
  %v705 = vmax.f32 %v479, 0.0
  %v706 = vmax.f32 %v484, 0.0
  %v707 = vmax.f32 %v489, 0.0
  %v708 = vmax.f32 %v494, 0.0
  %v709 = vmax.f32 %v499, 0.0
  %v710 = vmax.f32 %v504, 0.0
  %v711 = vmax.f32 %v509, 0.0
  %v712 = vmax.f32 %v514, 0.0
  %v713 = vmax.f32 %v519, 0.0
  %v714 = vmax.f32 %v524, 0.0
  %v715 = vmax.f32 %v529, 0.0
  %v716 = vmax.f32 %v534, 0.0
  %v717 = vmax.f32 %v539, 0.0
  %v718 = vmax.f32 %v544, 0.0
  %v719 = vmax.f32 %v549, 0.0
  %v720 = vmax.f32 %v554, 0.0
  %v721 = vmax.f32 %v559, 0.0
  %v722 = vmax.f32 %v564, 0.0
  %v723 = vmax.f32 %v569, 0.0
  %v724 = vmax.f32 %v574, 0.0
  %v725 = vmax.f32 %v579, 0.0
  %v726 = vmax.f32 %v584, 0.0
  %v727 = vmax.f32 %v589, 0.0
  %v728 = vmax.f32 %v594, 0.0
  %v729 = vmax.f32 %v599, 0.0
  %v730 = vmax.f32 %v604, 0.0
  %v731 = vmax.f32 %v609, 0.0
  %v732 = vmax.f32 %v614, 0.0
  %v733 = vmax.f32 %v619, 0.0
  %v734 = vmax.f32 %v624, 0.0
  %v735 = vmax.f32 %v629, 0.0
  %v736 = vmax.f32 %v634, 0.0
  %v737 = vmax.f32 %v639, 0.0
  %v738 = vmax.f32 %v644, 0.0
  %v739 = vmax.f32 %v649, 0.0
  %v740 = vmax.f32 %v654, 0.0
  %v741 = vmax.f32 %v659, 0.0
  %v742 = vmax.f32 %v664, 0.0
  %v743 = vmax.f32 %v669, 0.0
  %v744 = vmax.f32 %v674, 0.0
  %v745 = vmax.f32 %v679, 0.0
  %v746 = vld [vmem:[%s3] sm:$0xff]
  %v747 = vld [vmem:[%s3 + $0x8] sm:$0xff]
  %v748 = vld [vmem:[%s3 + $0x10] sm:$0xff]
  %v749 = vld [vmem:[%s3 + $0x18] sm:$0xff]
  %v750 = vld [vmem:[%s3 + $0x20] sm:$0xff]
  %v751 = vld [vmem:[%s3 + $0x28] sm:$0xff]
  %v752 = vld [vmem:[%s3 + $0x30] sm:$0xff]
  %v753 = vld [vmem:[%s3 + $0x38] sm:$0xff]
  %v754 = vld [vmem:[%s4] sm:$0x1]
  %v756 = vlaneseq
  %v757 = vshrl.u32 %v756, 7
  %v758 = vsub.s32 0, %v757
  %v759 = vrot.slane %v754, %v758
  %vm761 = vcmask 523264
  %v763 = vsel %vm761, %v682, 0
  %v766 = vsel %vm761, %v683, 0
  %v769 = vsel %vm761, %v684, 0
  %v772 = vsel %vm761, %v685, 0
  %v775 = vsel %vm761, %v686, 0
  %v778 = vsel %vm761, %v687, 0
  %v781 = vsel %vm761, %v688, 0
  %v784 = vsel %vm761, %v689, 0
  %v787 = vsel %vm761, %v690, 0
  %v790 = vsel %vm761, %v691, 0
  %v793 = vsel %vm761, %v692, 0
  %v796 = vsel %vm761, %v693, 0
  %v799 = vsel %vm761, %v694, 0
  %v802 = vsel %vm761, %v695, 0
  %v805 = vsel %vm761, %v696, 0
  %v808 = vsel %vm761, %v697, 0
  %v811 = vsel %vm761, %v698, 0
  %v814 = vsel %vm761, %v699, 0
  %v817 = vsel %vm761, %v700, 0
  %v820 = vsel %vm761, %v701, 0
  %v823 = vsel %vm761, %v702, 0
  %v826 = vsel %vm761, %v703, 0
  %v829 = vsel %vm761, %v704, 0
  %v832 = vsel %vm761, %v705, 0
  %v835 = vsel %vm761, %v706, 0
  %v838 = vsel %vm761, %v707, 0
  %v841 = vsel %vm761, %v708, 0
  %v844 = vsel %vm761, %v709, 0
  %v847 = vsel %vm761, %v710, 0
  %v850 = vsel %vm761, %v711, 0
  %v853 = vsel %vm761, %v712, 0
  %v856 = vsel %vm761, %v713, 0
  %v859 = vsel %vm761, %v714, 0
  %v862 = vsel %vm761, %v715, 0
  %v865 = vsel %vm761, %v716, 0
  %v868 = vsel %vm761, %v717, 0
  %v871 = vsel %vm761, %v718, 0
  %v874 = vsel %vm761, %v719, 0
  %v877 = vsel %vm761, %v720, 0
  %v880 = vsel %vm761, %v721, 0
  %v883 = vsel %vm761, %v722, 0
  %v886 = vsel %vm761, %v723, 0
  %v889 = vsel %vm761, %v724, 0
  %v892 = vsel %vm761, %v725, 0
  %v895 = vsel %vm761, %v726, 0
  %v898 = vsel %vm761, %v727, 0
  %v901 = vsel %vm761, %v728, 0
  %v904 = vsel %vm761, %v729, 0
  %v907 = vsel %vm761, %v730, 0
  %v910 = vsel %vm761, %v731, 0
  %v913 = vsel %vm761, %v732, 0
  %v916 = vsel %vm761, %v733, 0
  %v919 = vsel %vm761, %v734, 0
  %v922 = vsel %vm761, %v735, 0
  %v925 = vsel %vm761, %v736, 0
  %v928 = vsel %vm761, %v737, 0
  %v931 = vsel %vm761, %v738, 0
  %v934 = vsel %vm761, %v739, 0
  %v937 = vsel %vm761, %v740, 0
  %v940 = vsel %vm761, %v741, 0
  %v943 = vsel %vm761, %v742, 0
  %v946 = vsel %vm761, %v743, 0
  %v949 = vsel %vm761, %v744, 0
  %v952 = vsel %vm761, %v745, 0
  %954 = vmatprep.subr.mxu0 0.0
  %955 = vmatpush1.msra.mxu0 %v746
  %956 = vmatprep.subr.mxu0 0.0
  %957 = vmatpush1.msra.mxu0 %v747
  %958 = vmatprep.subr.mxu0 0.0
  %959 = vmatpush1.msra.mxu0 %v748
  %960 = vmatprep.subr.mxu0 0.0
  %961 = vmatpush1.msra.mxu0 %v749
  %962 = vmatprep.subr.mxu0 0.0
  %963 = vmatpush1.msra.mxu0 %v750
  %964 = vmatprep.subr.mxu0 0.0
  %965 = vmatpush1.msra.mxu0 %v751
  %966 = vmatprep.subr.mxu0 0.0
  %967 = vmatpush1.msra.mxu0 %v752
  %968 = vmatprep.subr.mxu0 0.0
  %969 = vmatpush1.msra.mxu0 %v753
  %970 = vmatprep.subr.mxu0 0.0
  %971 = vmatpush1.msra.mxu0 0.0
  %972 = vmatprep.subr.mxu0 0.0
  %973 = vmatpush1.msra.mxu0 0.0
  %974 = vmatprep.subr.mxu0 0.0
  %975 = vmatpush1.msra.mxu0 0.0
  %976 = vmatprep.subr.mxu0 0.0
  %977 = vmatpush1.msra.mxu0 0.0
  %978 = vmatprep.subr.mxu0 0.0
  %979 = vmatpush1.msra.mxu0 0.0
  %980 = vmatprep.subr.mxu0 0.0
  %981 = vmatpush1.msra.mxu0 0.0
  %982 = vmatprep.subr.mxu0 0.0
  %983 = vmatpush1.msra.mxu0 0.0
  %984 = vmatprep.subr.mxu0 0.0
  %985 = vmatpush1.msra.mxu0 0.0
  %986 = vmatprep.subr.mxu0 0.0
  %987 = vmatpush1.msra.mxu0 0.0
  %988 = vmatprep.subr.mxu0 0.0
  %989 = vmatpush1.msra.mxu0 0.0
  %990 = vmatprep.subr.mxu0 0.0
  %991 = vmatpush1.msra.mxu0 0.0
  %992 = vmatprep.subr.mxu0 0.0
  %993 = vmatpush1.msra.mxu0 0.0
  %994 = vmatprep.subr.mxu0 0.0
  %995 = vmatpush1.msra.mxu0 0.0
  %996 = vmatprep.subr.mxu0 0.0
  %997 = vmatpush1.msra.mxu0 0.0
  %998 = vmatprep.subr.mxu0 0.0
  %999 = vmatpush1.msra.mxu0 0.0
  %1000 = vmatprep.subr.mxu0 0.0
  %1001 = vmatpush1.msra.mxu0 0.0
  %1002 = vmatprep.subr.mxu0 0.0
  %1003 = vmatpush1.msra.mxu0 0.0
  %1004 = vmatprep.subr.mxu0 0.0
  %1005 = vmatpush1.msra.mxu0 0.0
  %1006 = vmatprep.subr.mxu0 0.0
  %1007 = vmatpush1.msra.mxu0 0.0
  %1008 = vmatprep.subr.mxu0 0.0
  %1009 = vmatpush1.msra.mxu0 0.0
  %1010 = vmatprep.subr.mxu0 0.0
  %1011 = vmatpush1.msra.mxu0 0.0
  %1012 = vmatprep.subr.mxu0 0.0
  %1013 = vmatpush1.msra.mxu0 0.0
  %1014 = vmatprep.subr.mxu0 0.0
  %1015 = vmatpush1.msra.mxu0 0.0
  %1016 = vmatprep.subr.mxu0 0.0
  %1017 = vmatpush1.msra.mxu0 0.0
  %1018 = vmatprep.mubr.f32.mxu0 0.0
  %1019 = vmatmul.mubr.f32.gmra.mrb[0].mxu0 %v763
  %v1020 = vpop.f32.mrb[0].mxu0
  %v1021 = vadd.f32 %v759, %v1020
  %v1022 = vpop.f32.mrb[0].mxu0
  %1023 = vmatprep.mubr.f32.mxu0 0.0
  %1024 = vmatmul.mubr.f32.gmra.mrb[0].mxu0 %v766
  %v1025 = vpop.f32.mrb[0].mxu0
  %v1026 = vadd.f32 %v759, %v1025
  %v1027 = vpop.f32.mrb[0].mxu0
  %1028 = vmatprep.mubr.f32.mxu0 0.0
  %1029 = vmatmul.mubr.f32.gmra.mrb[0].mxu0 %v769
  %v1030 = vpop.f32.mrb[0].mxu0
  %v1031 = vadd.f32 %v759, %v1030
  %v1032 = vpop.f32.mrb[0].mxu0
  %1033 = vmatprep.mubr.f32.mxu0 0.0
  %1034 = vmatmul.mubr.f32.gmra.mrb[0].mxu0 %v772
  %v1035 = vpop.f32.mrb[0].mxu0
  %v1036 = vadd.f32 %v759, %v1035
  %v1037 = vpop.f32.mrb[0].mxu0
  %1038 = vmatprep.mubr.f32.mxu0 0.0
  %1039 = vmatmul.mubr.f32.gmra.mrb[0].mxu0 %v775
  %v1040 = vpop.f32.mrb[0].mxu0
  %v1041 = vadd.f32 %v759, %v1040
  %v1042 = vpop.f32.mrb[0].mxu0
  %1043 = vmatprep.mubr.f32.mxu0 0.0
  %1044 = vmatmul.mubr.f32.gmra.mrb[0].mxu0 %v778
  %v1045 = vpop.f32.mrb[0].mxu0
  %v1046 = vadd.f32 %v759, %v1045
  %v1047 = vpop.f32.mrb[0].mxu0
  %1048 = vmatprep.mubr.f32.mxu0 0.0
  %1049 = vmatmul.mubr.f32.gmra.mrb[0].mxu0 %v781
  %v1050 = vpop.f32.mrb[0].mxu0
  %v1051 = vadd.f32 %v759, %v1050
  %v1052 = vpop.f32.mrb[0].mxu0
  %1053 = vmatprep.mubr.f32.mxu0 0.0
  %1054 = vmatmul.mubr.f32.gmra.mrb[0].mxu0 %v784
  %v1055 = vpop.f32.mrb[0].mxu0
  %v1056 = vadd.f32 %v759, %v1055
  %v1057 = vpop.f32.mrb[0].mxu0
  %1058 = vmatprep.mubr.f32.mxu0 0.0
  %1059 = vmatmul.mubr.f32.gmra.mrb[0].mxu0 %v787
  %v1060 = vpop.f32.mrb[0].mxu0
  %v1061 = vadd.f32 %v759, %v1060
  %v1062 = vpop.f32.mrb[0].mxu0
  %1063 = vmatprep.mubr.f32.mxu0 0.0
  %1064 = vmatmul.mubr.f32.gmra.mrb[0].mxu0 %v790
  %v1065 = vpop.f32.mrb[0].mxu0
  %v1066 = vadd.f32 %v759, %v1065
  %v1067 = vpop.f32.mrb[0].mxu0
  %1068 = vmatprep.mubr.f32.mxu0 0.0
  %1069 = vmatmul.mubr.f32.gmra.mrb[0].mxu0 %v793
  %v1070 = vpop.f32.mrb[0].mxu0
  %v1071 = vadd.f32 %v759, %v1070
  %v1072 = vpop.f32.mrb[0].mxu0
  %1073 = vmatprep.mubr.f32.mxu0 0.0
  %1074 = vmatmul.mubr.f32.gmra.mrb[0].mxu0 %v796
  %v1075 = vpop.f32.mrb[0].mxu0
  %v1076 = vadd.f32 %v759, %v1075
  %v1077 = vpop.f32.mrb[0].mxu0
  %1078 = vmatprep.mubr.f32.mxu0 0.0
  %1079 = vmatmul.mubr.f32.gmra.mrb[0].mxu0 %v799
  %v1080 = vpop.f32.mrb[0].mxu0
  %v1081 = vadd.f32 %v759, %v1080
  %v1082 = vpop.f32.mrb[0].mxu0
  %1083 = vmatprep.mubr.f32.mxu0 0.0
  %1084 = vmatmul.mubr.f32.gmra.mrb[0].mxu0 %v802
  %v1085 = vpop.f32.mrb[0].mxu0
  %v1086 = vadd.f32 %v759, %v1085
  %v1087 = vpop.f32.mrb[0].mxu0
  %1088 = vmatprep.mubr.f32.mxu0 0.0
  %1089 = vmatmul.mubr.f32.gmra.mrb[0].mxu0 %v805
  %v1090 = vpop.f32.mrb[0].mxu0
  %v1091 = vadd.f32 %v759, %v1090
  %v1092 = vpop.f32.mrb[0].mxu0
  %1093 = vmatprep.mubr.f32.mxu0 0.0
  %1094 = vmatmul.mubr.f32.gmra.mrb[0].mxu0 %v808
  %v1095 = vpop.f32.mrb[0].mxu0
  %v1096 = vadd.f32 %v759, %v1095
  %v1097 = vpop.f32.mrb[0].mxu0
  %1098 = vmatprep.mubr.f32.mxu0 0.0
  %1099 = vmatmul.mubr.f32.gmra.mrb[0].mxu0 %v811
  %v1100 = vpop.f32.mrb[0].mxu0
  %v1101 = vadd.f32 %v759, %v1100
  %v1102 = vpop.f32.mrb[0].mxu0
  %1103 = vmatprep.mubr.f32.mxu0 0.0
  %1104 = vmatmul.mubr.f32.gmra.mrb[0].mxu0 %v814
  %v1105 = vpop.f32.mrb[0].mxu0
  %v1106 = vadd.f32 %v759, %v1105
  %v1107 = vpop.f32.mrb[0].mxu0
  %1108 = vmatprep.mubr.f32.mxu0 0.0
  %1109 = vmatmul.mubr.f32.gmra.mrb[0].mxu0 %v817
  %v1110 = vpop.f32.mrb[0].mxu0
  %v1111 = vadd.f32 %v759, %v1110
  %v1112 = vpop.f32.mrb[0].mxu0
  %1113 = vmatprep.mubr.f32.mxu0 0.0
  %1114 = vmatmul.mubr.f32.gmra.mrb[0].mxu0 %v820
  %v1115 = vpop.f32.mrb[0].mxu0
  %v1116 = vadd.f32 %v759, %v1115
  %v1117 = vpop.f32.mrb[0].mxu0
  %1118 = vmatprep.mubr.f32.mxu0 0.0
  %1119 = vmatmul.mubr.f32.gmra.mrb[0].mxu0 %v823
  %v1120 = vpop.f32.mrb[0].mxu0
  %v1121 = vadd.f32 %v759, %v1120
  %v1122 = vpop.f32.mrb[0].mxu0
  %1123 = vmatprep.mubr.f32.mxu0 0.0
  %1124 = vmatmul.mubr.f32.gmra.mrb[0].mxu0 %v826
  %v1125 = vpop.f32.mrb[0].mxu0
  %v1126 = vadd.f32 %v759, %v1125
  %v1127 = vpop.f32.mrb[0].mxu0
  %1128 = vmatprep.mubr.f32.mxu0 0.0
  %1129 = vmatmul.mubr.f32.gmra.mrb[0].mxu0 %v829
  %v1130 = vpop.f32.mrb[0].mxu0
  %v1131 = vadd.f32 %v759, %v1130
  %v1132 = vpop.f32.mrb[0].mxu0
  %1133 = vmatprep.mubr.f32.mxu0 0.0
  %1134 = vmatmul.mubr.f32.gmra.mrb[0].mxu0 %v832
  %v1135 = vpop.f32.mrb[0].mxu0
  %v1136 = vadd.f32 %v759, %v1135
  %v1137 = vpop.f32.mrb[0].mxu0
  %1138 = vmatprep.mubr.f32.mxu0 0.0
  %1139 = vmatmul.mubr.f32.gmra.mrb[0].mxu0 %v835
  %v1140 = vpop.f32.mrb[0].mxu0
  %v1141 = vadd.f32 %v759, %v1140
  %v1142 = vpop.f32.mrb[0].mxu0
  %1143 = vmatprep.mubr.f32.mxu0 0.0
  %1144 = vmatmul.mubr.f32.gmra.mrb[0].mxu0 %v838
  %v1145 = vpop.f32.mrb[0].mxu0
  %v1146 = vadd.f32 %v759, %v1145
  %v1147 = vpop.f32.mrb[0].mxu0
  %1148 = vmatprep.mubr.f32.mxu0 0.0
  %1149 = vmatmul.mubr.f32.gmra.mrb[0].mxu0 %v841
  %v1150 = vpop.f32.mrb[0].mxu0
  %v1151 = vadd.f32 %v759, %v1150
  %v1152 = vpop.f32.mrb[0].mxu0
  %1153 = vmatprep.mubr.f32.mxu0 0.0
  %1154 = vmatmul.mubr.f32.gmra.mrb[0].mxu0 %v844
  %v1155 = vpop.f32.mrb[0].mxu0
  %v1156 = vadd.f32 %v759, %v1155
  %v1157 = vpop.f32.mrb[0].mxu0
  %1158 = vmatprep.mubr.f32.mxu0 0.0
  %1159 = vmatmul.mubr.f32.gmra.mrb[0].mxu0 %v847
  %v1160 = vpop.f32.mrb[0].mxu0
  %v1161 = vadd.f32 %v759, %v1160
  %v1162 = vpop.f32.mrb[0].mxu0
  %1163 = vmatprep.mubr.f32.mxu0 0.0
  %1164 = vmatmul.mubr.f32.gmra.mrb[0].mxu0 %v850
  %v1165 = vpop.f32.mrb[0].mxu0
  %v1166 = vadd.f32 %v759, %v1165
  %v1167 = vpop.f32.mrb[0].mxu0
  %1168 = vmatprep.mubr.f32.mxu0 0.0
  %1169 = vmatmul.mubr.f32.gmra.mrb[0].mxu0 %v853
  %v1170 = vpop.f32.mrb[0].mxu0
  %v1171 = vadd.f32 %v759, %v1170
  %v1172 = vpop.f32.mrb[0].mxu0
  %1173 = vmatprep.mubr.f32.mxu0 0.0
  %1174 = vmatmul.mubr.f32.gmra.mrb[0].mxu0 %v856
  %v1175 = vpop.f32.mrb[0].mxu0
  %v1176 = vadd.f32 %v759, %v1175
  %v1177 = vpop.f32.mrb[0].mxu0
  %1178 = vmatprep.mubr.f32.mxu0 0.0
  %1179 = vmatmul.mubr.f32.gmra.mrb[0].mxu0 %v859
  %v1180 = vpop.f32.mrb[0].mxu0
  %v1181 = vadd.f32 %v759, %v1180
  %v1182 = vpop.f32.mrb[0].mxu0
  %1183 = vmatprep.mubr.f32.mxu0 0.0
  %1184 = vmatmul.mubr.f32.gmra.mrb[0].mxu0 %v862
  %v1185 = vpop.f32.mrb[0].mxu0
  %v1186 = vadd.f32 %v759, %v1185
  %v1187 = vpop.f32.mrb[0].mxu0
  %1188 = vmatprep.mubr.f32.mxu0 0.0
  %1189 = vmatmul.mubr.f32.gmra.mrb[0].mxu0 %v865
  %v1190 = vpop.f32.mrb[0].mxu0
  %v1191 = vadd.f32 %v759, %v1190
  %v1192 = vpop.f32.mrb[0].mxu0
  %1193 = vmatprep.mubr.f32.mxu0 0.0
  %1194 = vmatmul.mubr.f32.gmra.mrb[0].mxu0 %v868
  %v1195 = vpop.f32.mrb[0].mxu0
  %v1196 = vadd.f32 %v759, %v1195
  %v1197 = vpop.f32.mrb[0].mxu0
  %1198 = vmatprep.mubr.f32.mxu0 0.0
  %1199 = vmatmul.mubr.f32.gmra.mrb[0].mxu0 %v871
  %v1200 = vpop.f32.mrb[0].mxu0
  %v1201 = vadd.f32 %v759, %v1200
  %v1202 = vpop.f32.mrb[0].mxu0
  %1203 = vmatprep.mubr.f32.mxu0 0.0
  %1204 = vmatmul.mubr.f32.gmra.mrb[0].mxu0 %v874
  %v1205 = vpop.f32.mrb[0].mxu0
  %v1206 = vadd.f32 %v759, %v1205
  %v1207 = vpop.f32.mrb[0].mxu0
  %1208 = vmatprep.mubr.f32.mxu0 0.0
  %1209 = vmatmul.mubr.f32.gmra.mrb[0].mxu0 %v877
  %v1210 = vpop.f32.mrb[0].mxu0
  %v1211 = vadd.f32 %v759, %v1210
  %v1212 = vpop.f32.mrb[0].mxu0
  %1213 = vmatprep.mubr.f32.mxu0 0.0
  %1214 = vmatmul.mubr.f32.gmra.mrb[0].mxu0 %v880
  %v1215 = vpop.f32.mrb[0].mxu0
  %v1216 = vadd.f32 %v759, %v1215
  %v1217 = vpop.f32.mrb[0].mxu0
  %1218 = vmatprep.mubr.f32.mxu0 0.0
  %1219 = vmatmul.mubr.f32.gmra.mrb[0].mxu0 %v883
  %v1220 = vpop.f32.mrb[0].mxu0
  %v1221 = vadd.f32 %v759, %v1220
  %v1222 = vpop.f32.mrb[0].mxu0
  %1223 = vmatprep.mubr.f32.mxu0 0.0
  %1224 = vmatmul.mubr.f32.gmra.mrb[0].mxu0 %v886
  %v1225 = vpop.f32.mrb[0].mxu0
  %v1226 = vadd.f32 %v759, %v1225
  %v1227 = vpop.f32.mrb[0].mxu0
  %1228 = vmatprep.mubr.f32.mxu0 0.0
  %1229 = vmatmul.mubr.f32.gmra.mrb[0].mxu0 %v889
  %v1230 = vpop.f32.mrb[0].mxu0
  %v1231 = vadd.f32 %v759, %v1230
  %v1232 = vpop.f32.mrb[0].mxu0
  %1233 = vmatprep.mubr.f32.mxu0 0.0
  %1234 = vmatmul.mubr.f32.gmra.mrb[0].mxu0 %v892
  %v1235 = vpop.f32.mrb[0].mxu0
  %v1236 = vadd.f32 %v759, %v1235
  %v1237 = vpop.f32.mrb[0].mxu0
  %1238 = vmatprep.mubr.f32.mxu0 0.0
  %1239 = vmatmul.mubr.f32.gmra.mrb[0].mxu0 %v895
  %v1240 = vpop.f32.mrb[0].mxu0
  %v1241 = vadd.f32 %v759, %v1240
  %v1242 = vpop.f32.mrb[0].mxu0
  %1243 = vmatprep.mubr.f32.mxu0 0.0
  %1244 = vmatmul.mubr.f32.gmra.mrb[0].mxu0 %v898
  %v1245 = vpop.f32.mrb[0].mxu0
  %v1246 = vadd.f32 %v759, %v1245
  %v1247 = vpop.f32.mrb[0].mxu0
  %1248 = vmatprep.mubr.f32.mxu0 0.0
  %1249 = vmatmul.mubr.f32.gmra.mrb[0].mxu0 %v901
  %v1250 = vpop.f32.mrb[0].mxu0
  %v1251 = vadd.f32 %v759, %v1250
  %v1252 = vpop.f32.mrb[0].mxu0
  %1253 = vmatprep.mubr.f32.mxu0 0.0
  %1254 = vmatmul.mubr.f32.gmra.mrb[0].mxu0 %v904
  %v1255 = vpop.f32.mrb[0].mxu0
  %v1256 = vadd.f32 %v759, %v1255
  %v1257 = vpop.f32.mrb[0].mxu0
  %1258 = vmatprep.mubr.f32.mxu0 0.0
  %1259 = vmatmul.mubr.f32.gmra.mrb[0].mxu0 %v907
  %v1260 = vpop.f32.mrb[0].mxu0
  %v1261 = vadd.f32 %v759, %v1260
  %v1262 = vpop.f32.mrb[0].mxu0
  %1263 = vmatprep.mubr.f32.mxu0 0.0
  %1264 = vmatmul.mubr.f32.gmra.mrb[0].mxu0 %v910
  %v1265 = vpop.f32.mrb[0].mxu0
  %v1266 = vadd.f32 %v759, %v1265
  %v1267 = vpop.f32.mrb[0].mxu0
  %1268 = vmatprep.mubr.f32.mxu0 0.0
  %1269 = vmatmul.mubr.f32.gmra.mrb[0].mxu0 %v913
  %v1270 = vpop.f32.mrb[0].mxu0
  %v1271 = vadd.f32 %v759, %v1270
  %v1272 = vpop.f32.mrb[0].mxu0
  %1273 = vmatprep.mubr.f32.mxu0 0.0
  %1274 = vmatmul.mubr.f32.gmra.mrb[0].mxu0 %v916
  %v1275 = vpop.f32.mrb[0].mxu0
  %v1276 = vadd.f32 %v759, %v1275
  %v1277 = vpop.f32.mrb[0].mxu0
  %1278 = vmatprep.mubr.f32.mxu0 0.0
  %1279 = vmatmul.mubr.f32.gmra.mrb[0].mxu0 %v919
  %v1280 = vpop.f32.mrb[0].mxu0
  %v1281 = vadd.f32 %v759, %v1280
  %v1282 = vpop.f32.mrb[0].mxu0
  %1283 = vmatprep.mubr.f32.mxu0 0.0
  %1284 = vmatmul.mubr.f32.gmra.mrb[0].mxu0 %v922
  %v1285 = vpop.f32.mrb[0].mxu0
  %v1286 = vadd.f32 %v759, %v1285
  %v1287 = vpop.f32.mrb[0].mxu0
  %1288 = vmatprep.mubr.f32.mxu0 0.0
  %1289 = vmatmul.mubr.f32.gmra.mrb[0].mxu0 %v925
  %v1290 = vpop.f32.mrb[0].mxu0
  %v1291 = vadd.f32 %v759, %v1290
  %v1292 = vpop.f32.mrb[0].mxu0
  %1293 = vmatprep.mubr.f32.mxu0 0.0
  %1294 = vmatmul.mubr.f32.gmra.mrb[0].mxu0 %v928
  %v1295 = vpop.f32.mrb[0].mxu0
  %v1296 = vadd.f32 %v759, %v1295
  %v1297 = vpop.f32.mrb[0].mxu0
  %1298 = vmatprep.mubr.f32.mxu0 0.0
  %1299 = vmatmul.mubr.f32.gmra.mrb[0].mxu0 %v931
  %v1300 = vpop.f32.mrb[0].mxu0
  %v1301 = vadd.f32 %v759, %v1300
  %v1302 = vpop.f32.mrb[0].mxu0
  %1303 = vmatprep.mubr.f32.mxu0 0.0
  %1304 = vmatmul.mubr.f32.gmra.mrb[0].mxu0 %v934
  %v1305 = vpop.f32.mrb[0].mxu0
  %v1306 = vadd.f32 %v759, %v1305
  %v1307 = vpop.f32.mrb[0].mxu0
  %1308 = vmatprep.mubr.f32.mxu0 0.0
  %1309 = vmatmul.mubr.f32.gmra.mrb[0].mxu0 %v937
  %v1310 = vpop.f32.mrb[0].mxu0
  %v1311 = vadd.f32 %v759, %v1310
  %v1312 = vpop.f32.mrb[0].mxu0
  %1313 = vmatprep.mubr.f32.mxu0 0.0
  %1314 = vmatmul.mubr.f32.gmra.mrb[0].mxu0 %v940
  %v1315 = vpop.f32.mrb[0].mxu0
  %v1316 = vadd.f32 %v759, %v1315
  %v1317 = vpop.f32.mrb[0].mxu0
  %1318 = vmatprep.mubr.f32.mxu0 0.0
  %1319 = vmatmul.mubr.f32.gmra.mrb[0].mxu0 %v943
  %v1320 = vpop.f32.mrb[0].mxu0
  %v1321 = vadd.f32 %v759, %v1320
  %v1322 = vpop.f32.mrb[0].mxu0
  %1323 = vmatprep.mubr.f32.mxu0 0.0
  %1324 = vmatmul.mubr.f32.gmra.mrb[0].mxu0 %v946
  %v1325 = vpop.f32.mrb[0].mxu0
  %v1326 = vadd.f32 %v759, %v1325
  %v1327 = vpop.f32.mrb[0].mxu0
  %1328 = vmatprep.mubr.f32.mxu0 0.0
  %1329 = vmatmul.mubr.f32.gmra.mrb[0].mxu0 %v949
  %v1330 = vpop.f32.mrb[0].mxu0
  %v1331 = vadd.f32 %v759, %v1330
  %v1332 = vpop.f32.mrb[0].mxu0
  %1333 = vmatprep.mubr.f32.mxu0 0.0
  %1334 = vmatmul.mubr.f32.gmra.mrb[0].mxu0 %v952
  %v1335 = vpop.f32.mrb[0].mxu0
  %v1336 = vadd.f32 %v759, %v1335
  %v1337 = vpop.f32.mrb[0].mxu0
  %1338 = vdwg.mxu0
  %v1339 = vmax.f32 %v1021, 0.0
  %v1340 = vmax.f32 %v1026, 0.0
  %v1341 = vmax.f32 %v1031, 0.0
  %v1342 = vmax.f32 %v1036, 0.0
  %v1343 = vmax.f32 %v1041, 0.0
  %v1344 = vmax.f32 %v1046, 0.0
  %v1345 = vmax.f32 %v1051, 0.0
  %v1346 = vmax.f32 %v1056, 0.0
  %v1347 = vmax.f32 %v1061, 0.0
  %v1348 = vmax.f32 %v1066, 0.0
  %v1349 = vmax.f32 %v1071, 0.0
  %v1350 = vmax.f32 %v1076, 0.0
  %v1351 = vmax.f32 %v1081, 0.0
  %v1352 = vmax.f32 %v1086, 0.0
  %v1353 = vmax.f32 %v1091, 0.0
  %v1354 = vmax.f32 %v1096, 0.0
  %v1355 = vmax.f32 %v1101, 0.0
  %v1356 = vmax.f32 %v1106, 0.0
  %v1357 = vmax.f32 %v1111, 0.0
  %v1358 = vmax.f32 %v1116, 0.0
  %v1359 = vmax.f32 %v1121, 0.0
  %v1360 = vmax.f32 %v1126, 0.0
  %v1361 = vmax.f32 %v1131, 0.0
  %v1362 = vmax.f32 %v1136, 0.0
  %v1363 = vmax.f32 %v1141, 0.0
  %v1364 = vmax.f32 %v1146, 0.0
  %v1365 = vmax.f32 %v1151, 0.0
  %v1366 = vmax.f32 %v1156, 0.0
  %v1367 = vmax.f32 %v1161, 0.0
  %v1368 = vmax.f32 %v1166, 0.0
  %v1369 = vmax.f32 %v1171, 0.0
  %v1370 = vmax.f32 %v1176, 0.0
  %v1371 = vmax.f32 %v1181, 0.0
  %v1372 = vmax.f32 %v1186, 0.0
  %v1373 = vmax.f32 %v1191, 0.0
  %v1374 = vmax.f32 %v1196, 0.0
  %v1375 = vmax.f32 %v1201, 0.0
  %v1376 = vmax.f32 %v1206, 0.0
  %v1377 = vmax.f32 %v1211, 0.0
  %v1378 = vmax.f32 %v1216, 0.0
  %v1379 = vmax.f32 %v1221, 0.0
  %v1380 = vmax.f32 %v1226, 0.0
  %v1381 = vmax.f32 %v1231, 0.0
  %v1382 = vmax.f32 %v1236, 0.0
  %v1383 = vmax.f32 %v1241, 0.0
  %v1384 = vmax.f32 %v1246, 0.0
  %v1385 = vmax.f32 %v1251, 0.0
  %v1386 = vmax.f32 %v1256, 0.0
  %v1387 = vmax.f32 %v1261, 0.0
  %v1388 = vmax.f32 %v1266, 0.0
  %v1389 = vmax.f32 %v1271, 0.0
  %v1390 = vmax.f32 %v1276, 0.0
  %v1391 = vmax.f32 %v1281, 0.0
  %v1392 = vmax.f32 %v1286, 0.0
  %v1393 = vmax.f32 %v1291, 0.0
  %v1394 = vmax.f32 %v1296, 0.0
  %v1395 = vmax.f32 %v1301, 0.0
  %v1396 = vmax.f32 %v1306, 0.0
  %v1397 = vmax.f32 %v1311, 0.0
  %v1398 = vmax.f32 %v1316, 0.0
  %v1399 = vmax.f32 %v1321, 0.0
  %v1400 = vmax.f32 %v1326, 0.0
  %v1401 = vmax.f32 %v1331, 0.0
  %v1402 = vmax.f32 %v1336, 0.0
  %v1403 = vld [vmem:[%s5] sm:$0xff]
  %v1404 = vld [vmem:[%s5 + $0x8] sm:$0xff]
  %v1405 = vld [vmem:[%s5 + $0x10] sm:$0xff]
  %v1406 = vld [vmem:[%s5 + $0x18] sm:$0xff]
  %v1407 = vld [vmem:[%s5 + $0x20] sm:$0xff]
  %v1408 = vld [vmem:[%s5 + $0x28] sm:$0xff]
  %v1409 = vld [vmem:[%s5 + $0x30] sm:$0xff]
  %v1410 = vld [vmem:[%s5 + $0x38] sm:$0xff]
  %v1411 = vld [vmem:[%s5 + $0x40] sm:$0xff]
  %v1412 = vld [vmem:[%s5 + $0x48] sm:$0xff]
  %v1413 = vld [vmem:[%s5 + $0x50] sm:$0xff]
  %v1414 = vld [vmem:[%s5 + $0x58] sm:$0xff]
  %v1415 = vld [vmem:[%s5 + $0x60] sm:$0xff]
  %v1416 = vld [vmem:[%s5 + $0x68] sm:$0xff]
  %v1417 = vld [vmem:[%s5 + $0x70] sm:$0xff]
  %v1418 = vld [vmem:[%s5 + $0x78] sm:$0xff]
  %v1419 = vld [vmem:[%s6] sm:$0x3]
  %v1421 = vlaneseq
  %v1422 = vshrl.u32 %v1421, 7
  %v1423 = vsub.s32 0, %v1422
  %v1424 = vrot.slane %v1419, %v1423
  %v1425 = vlaneseq
  %v1426 = vshrl.u32 %v1425, 7
  %v1427 = vsub.s32 1, %v1426
  %v1428 = vrot.slane %v1419, %v1427
  %v1432 = vsel %vm761, %v1339, 0
  %v1435 = vsel %vm761, %v1340, 0
  %v1438 = vsel %vm761, %v1341, 0
  %v1441 = vsel %vm761, %v1342, 0
  %v1444 = vsel %vm761, %v1343, 0
  %v1447 = vsel %vm761, %v1344, 0
  %v1450 = vsel %vm761, %v1345, 0
  %v1453 = vsel %vm761, %v1346, 0
  %v1456 = vsel %vm761, %v1347, 0
  %v1459 = vsel %vm761, %v1348, 0
  %v1462 = vsel %vm761, %v1349, 0
  %v1465 = vsel %vm761, %v1350, 0
  %v1468 = vsel %vm761, %v1351, 0
  %v1471 = vsel %vm761, %v1352, 0
  %v1474 = vsel %vm761, %v1353, 0
  %v1477 = vsel %vm761, %v1354, 0
  %v1480 = vsel %vm761, %v1355, 0
  %v1483 = vsel %vm761, %v1356, 0
  %v1486 = vsel %vm761, %v1357, 0
  %v1489 = vsel %vm761, %v1358, 0
  %v1492 = vsel %vm761, %v1359, 0
  %v1495 = vsel %vm761, %v1360, 0
  %v1498 = vsel %vm761, %v1361, 0
  %v1501 = vsel %vm761, %v1362, 0
  %v1504 = vsel %vm761, %v1363, 0
  %v1507 = vsel %vm761, %v1364, 0
  %v1510 = vsel %vm761, %v1365, 0
  %v1513 = vsel %vm761, %v1366, 0
  %v1516 = vsel %vm761, %v1367, 0
  %v1519 = vsel %vm761, %v1368, 0
  %v1522 = vsel %vm761, %v1369, 0
  %v1525 = vsel %vm761, %v1370, 0
  %v1528 = vsel %vm761, %v1371, 0
  %v1531 = vsel %vm761, %v1372, 0
  %v1534 = vsel %vm761, %v1373, 0
  %v1537 = vsel %vm761, %v1374, 0
  %v1540 = vsel %vm761, %v1375, 0
  %v1543 = vsel %vm761, %v1376, 0
  %v1546 = vsel %vm761, %v1377, 0
  %v1549 = vsel %vm761, %v1378, 0
  %v1552 = vsel %vm761, %v1379, 0
  %v1555 = vsel %vm761, %v1380, 0
  %v1558 = vsel %vm761, %v1381, 0
  %v1561 = vsel %vm761, %v1382, 0
  %v1564 = vsel %vm761, %v1383, 0
  %v1567 = vsel %vm761, %v1384, 0
  %v1570 = vsel %vm761, %v1385, 0
  %v1573 = vsel %vm761, %v1386, 0
  %v1576 = vsel %vm761, %v1387, 0
  %v1579 = vsel %vm761, %v1388, 0
  %v1582 = vsel %vm761, %v1389, 0
  %v1585 = vsel %vm761, %v1390, 0
  %v1588 = vsel %vm761, %v1391, 0
  %v1591 = vsel %vm761, %v1392, 0
  %v1594 = vsel %vm761, %v1393, 0
  %v1597 = vsel %vm761, %v1394, 0
  %v1600 = vsel %vm761, %v1395, 0
  %v1603 = vsel %vm761, %v1396, 0
  %v1606 = vsel %vm761, %v1397, 0
  %v1609 = vsel %vm761, %v1398, 0
  %v1612 = vsel %vm761, %v1399, 0
  %v1615 = vsel %vm761, %v1400, 0
  %v1618 = vsel %vm761, %v1401, 0
  %v1621 = vsel %vm761, %v1402, 0
  %1623 = vmatprep.subr.mxu0 %v1404
  %1624 = vmatpush1.msra.mxu0 %v1403
  %1625 = vmatprep.subr.mxu0 %v1406
  %1626 = vmatpush1.msra.mxu0 %v1405
  %1627 = vmatprep.subr.mxu0 %v1408
  %1628 = vmatpush1.msra.mxu0 %v1407
  %1629 = vmatprep.subr.mxu0 %v1410
  %1630 = vmatpush1.msra.mxu0 %v1409
  %1631 = vmatprep.subr.mxu0 %v1412
  %1632 = vmatpush1.msra.mxu0 %v1411
  %1633 = vmatprep.subr.mxu0 %v1414
  %1634 = vmatpush1.msra.mxu0 %v1413
  %1635 = vmatprep.subr.mxu0 %v1416
  %1636 = vmatpush1.msra.mxu0 %v1415
  %1637 = vmatprep.subr.mxu0 %v1418
  %1638 = vmatpush1.msra.mxu0 %v1417
  %1639 = vmatprep.subr.mxu0 0.0
  %1640 = vmatpush1.msra.mxu0 0.0
  %1641 = vmatprep.subr.mxu0 0.0
  %1642 = vmatpush1.msra.mxu0 0.0
  %1643 = vmatprep.subr.mxu0 0.0
  %1644 = vmatpush1.msra.mxu0 0.0
  %1645 = vmatprep.subr.mxu0 0.0
  %1646 = vmatpush1.msra.mxu0 0.0
  %1647 = vmatprep.subr.mxu0 0.0
  %1648 = vmatpush1.msra.mxu0 0.0
  %1649 = vmatprep.subr.mxu0 0.0
  %1650 = vmatpush1.msra.mxu0 0.0
  %1651 = vmatprep.subr.mxu0 0.0
  %1652 = vmatpush1.msra.mxu0 0.0
  %1653 = vmatprep.subr.mxu0 0.0
  %1654 = vmatpush1.msra.mxu0 0.0
  %1655 = vmatprep.subr.mxu0 0.0
  %1656 = vmatpush1.msra.mxu0 0.0
  %1657 = vmatprep.subr.mxu0 0.0
  %1658 = vmatpush1.msra.mxu0 0.0
  %1659 = vmatprep.subr.mxu0 0.0
  %1660 = vmatpush1.msra.mxu0 0.0
  %1661 = vmatprep.subr.mxu0 0.0
  %1662 = vmatpush1.msra.mxu0 0.0
  %1663 = vmatprep.subr.mxu0 0.0
  %1664 = vmatpush1.msra.mxu0 0.0
  %1665 = vmatprep.subr.mxu0 0.0
  %1666 = vmatpush1.msra.mxu0 0.0
  %1667 = vmatprep.subr.mxu0 0.0
  %1668 = vmatpush1.msra.mxu0 0.0
  %1669 = vmatprep.subr.mxu0 0.0
  %1670 = vmatpush1.msra.mxu0 0.0
  %1671 = vmatprep.subr.mxu0 0.0
  %1672 = vmatpush1.msra.mxu0 0.0
  %1673 = vmatprep.subr.mxu0 0.0
  %1674 = vmatpush1.msra.mxu0 0.0
  %1675 = vmatprep.subr.mxu0 0.0
  %1676 = vmatpush1.msra.mxu0 0.0
  %1677 = vmatprep.subr.mxu0 0.0
  %1678 = vmatpush1.msra.mxu0 0.0
  %1679 = vmatprep.subr.mxu0 0.0
  %1680 = vmatpush1.msra.mxu0 0.0
  %1681 = vmatprep.subr.mxu0 0.0
  %1682 = vmatpush1.msra.mxu0 0.0
  %1683 = vmatprep.subr.mxu0 0.0
  %1684 = vmatpush1.msra.mxu0 0.0
  %1685 = vmatprep.subr.mxu0 0.0
  %1686 = vmatpush1.msra.mxu0 0.0
  %1687 = vmatprep.mubr.f32.mxu0 0.0
  %1688 = vmatmul.mubr.f32.gmra.mrb[0].mxu0 %v1432
  %v1689 = vpop.f32.mrb[0].mxu0
  %v1690 = vadd.f32 %v1424, %v1689
  %v1691 = vpop.f32.mrb[0].mxu0
  %v1692 = vadd.f32 %v1428, %v1691
  %1693 = vmatprep.mubr.f32.mxu0 0.0
  %1694 = vmatmul.mubr.f32.gmra.mrb[0].mxu0 %v1435
  %v1695 = vpop.f32.mrb[0].mxu0
  %v1696 = vadd.f32 %v1424, %v1695
  %v1697 = vpop.f32.mrb[0].mxu0
  %v1698 = vadd.f32 %v1428, %v1697
  %1699 = vmatprep.mubr.f32.mxu0 0.0
  %1700 = vmatmul.mubr.f32.gmra.mrb[0].mxu0 %v1438
  %v1701 = vpop.f32.mrb[0].mxu0
  %v1702 = vadd.f32 %v1424, %v1701
  %v1703 = vpop.f32.mrb[0].mxu0
  %v1704 = vadd.f32 %v1428, %v1703
  %1705 = vmatprep.mubr.f32.mxu0 0.0
  %1706 = vmatmul.mubr.f32.gmra.mrb[0].mxu0 %v1441
  %v1707 = vpop.f32.mrb[0].mxu0
  %v1708 = vadd.f32 %v1424, %v1707
  %v1709 = vpop.f32.mrb[0].mxu0
  %v1710 = vadd.f32 %v1428, %v1709
  %1711 = vmatprep.mubr.f32.mxu0 0.0
  %1712 = vmatmul.mubr.f32.gmra.mrb[0].mxu0 %v1444
  %v1713 = vpop.f32.mrb[0].mxu0
  %v1714 = vadd.f32 %v1424, %v1713
  %v1715 = vpop.f32.mrb[0].mxu0
  %v1716 = vadd.f32 %v1428, %v1715
  %1717 = vmatprep.mubr.f32.mxu0 0.0
  %1718 = vmatmul.mubr.f32.gmra.mrb[0].mxu0 %v1447
  %v1719 = vpop.f32.mrb[0].mxu0
  %v1720 = vadd.f32 %v1424, %v1719
  %v1721 = vpop.f32.mrb[0].mxu0
  %v1722 = vadd.f32 %v1428, %v1721
  %1723 = vmatprep.mubr.f32.mxu0 0.0
  %1724 = vmatmul.mubr.f32.gmra.mrb[0].mxu0 %v1450
  %v1725 = vpop.f32.mrb[0].mxu0
  %v1726 = vadd.f32 %v1424, %v1725
  %v1727 = vpop.f32.mrb[0].mxu0
  %v1728 = vadd.f32 %v1428, %v1727
  %1729 = vmatprep.mubr.f32.mxu0 0.0
  %1730 = vmatmul.mubr.f32.gmra.mrb[0].mxu0 %v1453
  %v1731 = vpop.f32.mrb[0].mxu0
  %v1732 = vadd.f32 %v1424, %v1731
  %v1733 = vpop.f32.mrb[0].mxu0
  %v1734 = vadd.f32 %v1428, %v1733
  %1735 = vmatprep.mubr.f32.mxu0 0.0
  %1736 = vmatmul.mubr.f32.gmra.mrb[0].mxu0 %v1456
  %v1737 = vpop.f32.mrb[0].mxu0
  %v1738 = vadd.f32 %v1424, %v1737
  %v1739 = vpop.f32.mrb[0].mxu0
  %v1740 = vadd.f32 %v1428, %v1739
  %1741 = vmatprep.mubr.f32.mxu0 0.0
  %1742 = vmatmul.mubr.f32.gmra.mrb[0].mxu0 %v1459
  %v1743 = vpop.f32.mrb[0].mxu0
  %v1744 = vadd.f32 %v1424, %v1743
  %v1745 = vpop.f32.mrb[0].mxu0
  %v1746 = vadd.f32 %v1428, %v1745
  %1747 = vmatprep.mubr.f32.mxu0 0.0
  %1748 = vmatmul.mubr.f32.gmra.mrb[0].mxu0 %v1462
  %v1749 = vpop.f32.mrb[0].mxu0
  %v1750 = vadd.f32 %v1424, %v1749
  %v1751 = vpop.f32.mrb[0].mxu0
  %v1752 = vadd.f32 %v1428, %v1751
  %1753 = vmatprep.mubr.f32.mxu0 0.0
  %1754 = vmatmul.mubr.f32.gmra.mrb[0].mxu0 %v1465
  %v1755 = vpop.f32.mrb[0].mxu0
  %v1756 = vadd.f32 %v1424, %v1755
  %v1757 = vpop.f32.mrb[0].mxu0
  %v1758 = vadd.f32 %v1428, %v1757
  %1759 = vmatprep.mubr.f32.mxu0 0.0
  %1760 = vmatmul.mubr.f32.gmra.mrb[0].mxu0 %v1468
  %v1761 = vpop.f32.mrb[0].mxu0
  %v1762 = vadd.f32 %v1424, %v1761
  %v1763 = vpop.f32.mrb[0].mxu0
  %v1764 = vadd.f32 %v1428, %v1763
  %1765 = vmatprep.mubr.f32.mxu0 0.0
  %1766 = vmatmul.mubr.f32.gmra.mrb[0].mxu0 %v1471
  %v1767 = vpop.f32.mrb[0].mxu0
  %v1768 = vadd.f32 %v1424, %v1767
  %v1769 = vpop.f32.mrb[0].mxu0
  %v1770 = vadd.f32 %v1428, %v1769
  %1771 = vmatprep.mubr.f32.mxu0 0.0
  %1772 = vmatmul.mubr.f32.gmra.mrb[0].mxu0 %v1474
  %v1773 = vpop.f32.mrb[0].mxu0
  %v1774 = vadd.f32 %v1424, %v1773
  %v1775 = vpop.f32.mrb[0].mxu0
  %v1776 = vadd.f32 %v1428, %v1775
  %1777 = vmatprep.mubr.f32.mxu0 0.0
  %1778 = vmatmul.mubr.f32.gmra.mrb[0].mxu0 %v1477
  %v1779 = vpop.f32.mrb[0].mxu0
  %v1780 = vadd.f32 %v1424, %v1779
  %v1781 = vpop.f32.mrb[0].mxu0
  %v1782 = vadd.f32 %v1428, %v1781
  %1783 = vmatprep.mubr.f32.mxu0 0.0
  %1784 = vmatmul.mubr.f32.gmra.mrb[0].mxu0 %v1480
  %v1785 = vpop.f32.mrb[0].mxu0
  %v1786 = vadd.f32 %v1424, %v1785
  %v1787 = vpop.f32.mrb[0].mxu0
  %v1788 = vadd.f32 %v1428, %v1787
  %1789 = vmatprep.mubr.f32.mxu0 0.0
  %1790 = vmatmul.mubr.f32.gmra.mrb[0].mxu0 %v1483
  %v1791 = vpop.f32.mrb[0].mxu0
  %v1792 = vadd.f32 %v1424, %v1791
  %v1793 = vpop.f32.mrb[0].mxu0
  %v1794 = vadd.f32 %v1428, %v1793
  %1795 = vmatprep.mubr.f32.mxu0 0.0
  %1796 = vmatmul.mubr.f32.gmra.mrb[0].mxu0 %v1486
  %v1797 = vpop.f32.mrb[0].mxu0
  %v1798 = vadd.f32 %v1424, %v1797
  %v1799 = vpop.f32.mrb[0].mxu0
  %v1800 = vadd.f32 %v1428, %v1799
  %1801 = vmatprep.mubr.f32.mxu0 0.0
  %1802 = vmatmul.mubr.f32.gmra.mrb[0].mxu0 %v1489
  %v1803 = vpop.f32.mrb[0].mxu0
  %v1804 = vadd.f32 %v1424, %v1803
  %v1805 = vpop.f32.mrb[0].mxu0
  %v1806 = vadd.f32 %v1428, %v1805
  %1807 = vmatprep.mubr.f32.mxu0 0.0
  %1808 = vmatmul.mubr.f32.gmra.mrb[0].mxu0 %v1492
  %v1809 = vpop.f32.mrb[0].mxu0
  %v1810 = vadd.f32 %v1424, %v1809
  %v1811 = vpop.f32.mrb[0].mxu0
  %v1812 = vadd.f32 %v1428, %v1811
  %1813 = vmatprep.mubr.f32.mxu0 0.0
  %1814 = vmatmul.mubr.f32.gmra.mrb[0].mxu0 %v1495
  %v1815 = vpop.f32.mrb[0].mxu0
  %v1816 = vadd.f32 %v1424, %v1815
  %v1817 = vpop.f32.mrb[0].mxu0
  %v1818 = vadd.f32 %v1428, %v1817
  %1819 = vmatprep.mubr.f32.mxu0 0.0
  %1820 = vmatmul.mubr.f32.gmra.mrb[0].mxu0 %v1498
  %v1821 = vpop.f32.mrb[0].mxu0
  %v1822 = vadd.f32 %v1424, %v1821
  %v1823 = vpop.f32.mrb[0].mxu0
  %v1824 = vadd.f32 %v1428, %v1823
  %1825 = vmatprep.mubr.f32.mxu0 0.0
  %1826 = vmatmul.mubr.f32.gmra.mrb[0].mxu0 %v1501
  %v1827 = vpop.f32.mrb[0].mxu0
  %v1828 = vadd.f32 %v1424, %v1827
  %v1829 = vpop.f32.mrb[0].mxu0
  %v1830 = vadd.f32 %v1428, %v1829
  %1831 = vmatprep.mubr.f32.mxu0 0.0
  %1832 = vmatmul.mubr.f32.gmra.mrb[0].mxu0 %v1504
  %v1833 = vpop.f32.mrb[0].mxu0
  %v1834 = vadd.f32 %v1424, %v1833
  %v1835 = vpop.f32.mrb[0].mxu0
  %v1836 = vadd.f32 %v1428, %v1835
  %1837 = vmatprep.mubr.f32.mxu0 0.0
  %1838 = vmatmul.mubr.f32.gmra.mrb[0].mxu0 %v1507
  %v1839 = vpop.f32.mrb[0].mxu0
  %v1840 = vadd.f32 %v1424, %v1839
  %v1841 = vpop.f32.mrb[0].mxu0
  %v1842 = vadd.f32 %v1428, %v1841
  %1843 = vmatprep.mubr.f32.mxu0 0.0
  %1844 = vmatmul.mubr.f32.gmra.mrb[0].mxu0 %v1510
  %v1845 = vpop.f32.mrb[0].mxu0
  %v1846 = vadd.f32 %v1424, %v1845
  %v1847 = vpop.f32.mrb[0].mxu0
  %v1848 = vadd.f32 %v1428, %v1847
  %1849 = vmatprep.mubr.f32.mxu0 0.0
  %1850 = vmatmul.mubr.f32.gmra.mrb[0].mxu0 %v1513
  %v1851 = vpop.f32.mrb[0].mxu0
  %v1852 = vadd.f32 %v1424, %v1851
  %v1853 = vpop.f32.mrb[0].mxu0
  %v1854 = vadd.f32 %v1428, %v1853
  %1855 = vmatprep.mubr.f32.mxu0 0.0
  %1856 = vmatmul.mubr.f32.gmra.mrb[0].mxu0 %v1516
  %v1857 = vpop.f32.mrb[0].mxu0
  %v1858 = vadd.f32 %v1424, %v1857
  %v1859 = vpop.f32.mrb[0].mxu0
  %v1860 = vadd.f32 %v1428, %v1859
  %1861 = vmatprep.mubr.f32.mxu0 0.0
  %1862 = vmatmul.mubr.f32.gmra.mrb[0].mxu0 %v1519
  %v1863 = vpop.f32.mrb[0].mxu0
  %v1864 = vadd.f32 %v1424, %v1863
  %v1865 = vpop.f32.mrb[0].mxu0
  %v1866 = vadd.f32 %v1428, %v1865
  %1867 = vmatprep.mubr.f32.mxu0 0.0
  %1868 = vmatmul.mubr.f32.gmra.mrb[0].mxu0 %v1522
  %v1869 = vpop.f32.mrb[0].mxu0
  %v1870 = vadd.f32 %v1424, %v1869
  %v1871 = vpop.f32.mrb[0].mxu0
  %v1872 = vadd.f32 %v1428, %v1871
  %1873 = vmatprep.mubr.f32.mxu0 0.0
  %1874 = vmatmul.mubr.f32.gmra.mrb[0].mxu0 %v1525
  %v1875 = vpop.f32.mrb[0].mxu0
  %v1876 = vadd.f32 %v1424, %v1875
  %v1877 = vpop.f32.mrb[0].mxu0
  %v1878 = vadd.f32 %v1428, %v1877
  %1879 = vmatprep.mubr.f32.mxu0 0.0
  %1880 = vmatmul.mubr.f32.gmra.mrb[0].mxu0 %v1528
  %v1881 = vpop.f32.mrb[0].mxu0
  %v1882 = vadd.f32 %v1424, %v1881
  %v1883 = vpop.f32.mrb[0].mxu0
  %v1884 = vadd.f32 %v1428, %v1883
  %1885 = vmatprep.mubr.f32.mxu0 0.0
  %1886 = vmatmul.mubr.f32.gmra.mrb[0].mxu0 %v1531
  %v1887 = vpop.f32.mrb[0].mxu0
  %v1888 = vadd.f32 %v1424, %v1887
  %v1889 = vpop.f32.mrb[0].mxu0
  %v1890 = vadd.f32 %v1428, %v1889
  %1891 = vmatprep.mubr.f32.mxu0 0.0
  %1892 = vmatmul.mubr.f32.gmra.mrb[0].mxu0 %v1534
  %v1893 = vpop.f32.mrb[0].mxu0
  %v1894 = vadd.f32 %v1424, %v1893
  %v1895 = vpop.f32.mrb[0].mxu0
  %v1896 = vadd.f32 %v1428, %v1895
  %1897 = vmatprep.mubr.f32.mxu0 0.0
  %1898 = vmatmul.mubr.f32.gmra.mrb[0].mxu0 %v1537
  %v1899 = vpop.f32.mrb[0].mxu0
  %v1900 = vadd.f32 %v1424, %v1899
  %v1901 = vpop.f32.mrb[0].mxu0
  %v1902 = vadd.f32 %v1428, %v1901
  %1903 = vmatprep.mubr.f32.mxu0 0.0
  %1904 = vmatmul.mubr.f32.gmra.mrb[0].mxu0 %v1540
  %v1905 = vpop.f32.mrb[0].mxu0
  %v1906 = vadd.f32 %v1424, %v1905
  %v1907 = vpop.f32.mrb[0].mxu0
  %v1908 = vadd.f32 %v1428, %v1907
  %1909 = vmatprep.mubr.f32.mxu0 0.0
  %1910 = vmatmul.mubr.f32.gmra.mrb[0].mxu0 %v1543
  %v1911 = vpop.f32.mrb[0].mxu0
  %v1912 = vadd.f32 %v1424, %v1911
  %v1913 = vpop.f32.mrb[0].mxu0
  %v1914 = vadd.f32 %v1428, %v1913
  %1915 = vmatprep.mubr.f32.mxu0 0.0
  %1916 = vmatmul.mubr.f32.gmra.mrb[0].mxu0 %v1546
  %v1917 = vpop.f32.mrb[0].mxu0
  %v1918 = vadd.f32 %v1424, %v1917
  %v1919 = vpop.f32.mrb[0].mxu0
  %v1920 = vadd.f32 %v1428, %v1919
  %1921 = vmatprep.mubr.f32.mxu0 0.0
  %1922 = vmatmul.mubr.f32.gmra.mrb[0].mxu0 %v1549
  %v1923 = vpop.f32.mrb[0].mxu0
  %v1924 = vadd.f32 %v1424, %v1923
  %v1925 = vpop.f32.mrb[0].mxu0
  %v1926 = vadd.f32 %v1428, %v1925
  %1927 = vmatprep.mubr.f32.mxu0 0.0
  %1928 = vmatmul.mubr.f32.gmra.mrb[0].mxu0 %v1552
  %v1929 = vpop.f32.mrb[0].mxu0
  %v1930 = vadd.f32 %v1424, %v1929
  %v1931 = vpop.f32.mrb[0].mxu0
  %v1932 = vadd.f32 %v1428, %v1931
  %1933 = vmatprep.mubr.f32.mxu0 0.0
  %1934 = vmatmul.mubr.f32.gmra.mrb[0].mxu0 %v1555
  %v1935 = vpop.f32.mrb[0].mxu0
  %v1936 = vadd.f32 %v1424, %v1935
  %v1937 = vpop.f32.mrb[0].mxu0
  %v1938 = vadd.f32 %v1428, %v1937
  %1939 = vmatprep.mubr.f32.mxu0 0.0
  %1940 = vmatmul.mubr.f32.gmra.mrb[0].mxu0 %v1558
  %v1941 = vpop.f32.mrb[0].mxu0
  %v1942 = vadd.f32 %v1424, %v1941
  %v1943 = vpop.f32.mrb[0].mxu0
  %v1944 = vadd.f32 %v1428, %v1943
  %1945 = vmatprep.mubr.f32.mxu0 0.0
  %1946 = vmatmul.mubr.f32.gmra.mrb[0].mxu0 %v1561
  %v1947 = vpop.f32.mrb[0].mxu0
  %v1948 = vadd.f32 %v1424, %v1947
  %v1949 = vpop.f32.mrb[0].mxu0
  %v1950 = vadd.f32 %v1428, %v1949
  %1951 = vmatprep.mubr.f32.mxu0 0.0
  %1952 = vmatmul.mubr.f32.gmra.mrb[0].mxu0 %v1564
  %v1953 = vpop.f32.mrb[0].mxu0
  %v1954 = vadd.f32 %v1424, %v1953
  %v1955 = vpop.f32.mrb[0].mxu0
  %v1956 = vadd.f32 %v1428, %v1955
  %1957 = vmatprep.mubr.f32.mxu0 0.0
  %1958 = vmatmul.mubr.f32.gmra.mrb[0].mxu0 %v1567
  %v1959 = vpop.f32.mrb[0].mxu0
  %v1960 = vadd.f32 %v1424, %v1959
  %v1961 = vpop.f32.mrb[0].mxu0
  %v1962 = vadd.f32 %v1428, %v1961
  %1963 = vmatprep.mubr.f32.mxu0 0.0
  %1964 = vmatmul.mubr.f32.gmra.mrb[0].mxu0 %v1570
  %v1965 = vpop.f32.mrb[0].mxu0
  %v1966 = vadd.f32 %v1424, %v1965
  %v1967 = vpop.f32.mrb[0].mxu0
  %v1968 = vadd.f32 %v1428, %v1967
  %1969 = vmatprep.mubr.f32.mxu0 0.0
  %1970 = vmatmul.mubr.f32.gmra.mrb[0].mxu0 %v1573
  %v1971 = vpop.f32.mrb[0].mxu0
  %v1972 = vadd.f32 %v1424, %v1971
  %v1973 = vpop.f32.mrb[0].mxu0
  %v1974 = vadd.f32 %v1428, %v1973
  %1975 = vmatprep.mubr.f32.mxu0 0.0
  %1976 = vmatmul.mubr.f32.gmra.mrb[0].mxu0 %v1576
  %v1977 = vpop.f32.mrb[0].mxu0
  %v1978 = vadd.f32 %v1424, %v1977
  %v1979 = vpop.f32.mrb[0].mxu0
  %v1980 = vadd.f32 %v1428, %v1979
  %1981 = vmatprep.mubr.f32.mxu0 0.0
  %1982 = vmatmul.mubr.f32.gmra.mrb[0].mxu0 %v1579
  %v1983 = vpop.f32.mrb[0].mxu0
  %v1984 = vadd.f32 %v1424, %v1983
  %v1985 = vpop.f32.mrb[0].mxu0
  %v1986 = vadd.f32 %v1428, %v1985
  %1987 = vmatprep.mubr.f32.mxu0 0.0
  %1988 = vmatmul.mubr.f32.gmra.mrb[0].mxu0 %v1582
  %v1989 = vpop.f32.mrb[0].mxu0
  %v1990 = vadd.f32 %v1424, %v1989
  %v1991 = vpop.f32.mrb[0].mxu0
  %v1992 = vadd.f32 %v1428, %v1991
  %1993 = vmatprep.mubr.f32.mxu0 0.0
  %1994 = vmatmul.mubr.f32.gmra.mrb[0].mxu0 %v1585
  %v1995 = vpop.f32.mrb[0].mxu0
  %v1996 = vadd.f32 %v1424, %v1995
  %v1997 = vpop.f32.mrb[0].mxu0
  %v1998 = vadd.f32 %v1428, %v1997
  %1999 = vmatprep.mubr.f32.mxu0 0.0
  %2000 = vmatmul.mubr.f32.gmra.mrb[0].mxu0 %v1588
  %v2001 = vpop.f32.mrb[0].mxu0
  %v2002 = vadd.f32 %v1424, %v2001
  %v2003 = vpop.f32.mrb[0].mxu0
  %v2004 = vadd.f32 %v1428, %v2003
  %2005 = vmatprep.mubr.f32.mxu0 0.0
  %2006 = vmatmul.mubr.f32.gmra.mrb[0].mxu0 %v1591
  %v2007 = vpop.f32.mrb[0].mxu0
  %v2008 = vadd.f32 %v1424, %v2007
  %v2009 = vpop.f32.mrb[0].mxu0
  %v2010 = vadd.f32 %v1428, %v2009
  %2011 = vmatprep.mubr.f32.mxu0 0.0
  %2012 = vmatmul.mubr.f32.gmra.mrb[0].mxu0 %v1594
  %v2013 = vpop.f32.mrb[0].mxu0
  %v2014 = vadd.f32 %v1424, %v2013
  %v2015 = vpop.f32.mrb[0].mxu0
  %v2016 = vadd.f32 %v1428, %v2015
  %2017 = vmatprep.mubr.f32.mxu0 0.0
  %2018 = vmatmul.mubr.f32.gmra.mrb[0].mxu0 %v1597
  %v2019 = vpop.f32.mrb[0].mxu0
  %v2020 = vadd.f32 %v1424, %v2019
  %v2021 = vpop.f32.mrb[0].mxu0
  %v2022 = vadd.f32 %v1428, %v2021
  %2023 = vmatprep.mubr.f32.mxu0 0.0
  %2024 = vmatmul.mubr.f32.gmra.mrb[0].mxu0 %v1600
  %v2025 = vpop.f32.mrb[0].mxu0
  %v2026 = vadd.f32 %v1424, %v2025
  %v2027 = vpop.f32.mrb[0].mxu0
  %v2028 = vadd.f32 %v1428, %v2027
  %2029 = vmatprep.mubr.f32.mxu0 0.0
  %2030 = vmatmul.mubr.f32.gmra.mrb[0].mxu0 %v1603
  %v2031 = vpop.f32.mrb[0].mxu0
  %v2032 = vadd.f32 %v1424, %v2031
  %v2033 = vpop.f32.mrb[0].mxu0
  %v2034 = vadd.f32 %v1428, %v2033
  %2035 = vmatprep.mubr.f32.mxu0 0.0
  %2036 = vmatmul.mubr.f32.gmra.mrb[0].mxu0 %v1606
  %v2037 = vpop.f32.mrb[0].mxu0
  %v2038 = vadd.f32 %v1424, %v2037
  %v2039 = vpop.f32.mrb[0].mxu0
  %v2040 = vadd.f32 %v1428, %v2039
  %2041 = vmatprep.mubr.f32.mxu0 0.0
  %2042 = vmatmul.mubr.f32.gmra.mrb[0].mxu0 %v1609
  %v2043 = vpop.f32.mrb[0].mxu0
  %v2044 = vadd.f32 %v1424, %v2043
  %v2045 = vpop.f32.mrb[0].mxu0
  %v2046 = vadd.f32 %v1428, %v2045
  %2047 = vmatprep.mubr.f32.mxu0 0.0
  %2048 = vmatmul.mubr.f32.gmra.mrb[0].mxu0 %v1612
  %v2049 = vpop.f32.mrb[0].mxu0
  %v2050 = vadd.f32 %v1424, %v2049
  %v2051 = vpop.f32.mrb[0].mxu0
  %v2052 = vadd.f32 %v1428, %v2051
  %2053 = vmatprep.mubr.f32.mxu0 0.0
  %2054 = vmatmul.mubr.f32.gmra.mrb[0].mxu0 %v1615
  %v2055 = vpop.f32.mrb[0].mxu0
  %v2056 = vadd.f32 %v1424, %v2055
  %v2057 = vpop.f32.mrb[0].mxu0
  %v2058 = vadd.f32 %v1428, %v2057
  %2059 = vmatprep.mubr.f32.mxu0 0.0
  %2060 = vmatmul.mubr.f32.gmra.mrb[0].mxu0 %v1618
  %v2061 = vpop.f32.mrb[0].mxu0
  %v2062 = vadd.f32 %v1424, %v2061
  %v2063 = vpop.f32.mrb[0].mxu0
  %v2064 = vadd.f32 %v1428, %v2063
  %2065 = vmatprep.mubr.f32.mxu0 0.0
  %2066 = vmatmul.mubr.f32.gmra.mrb[0].mxu0 %v1621
  %v2067 = vpop.f32.mrb[0].mxu0
  %v2068 = vadd.f32 %v1424, %v2067
  %v2069 = vpop.f32.mrb[0].mxu0
  %v2070 = vadd.f32 %v1428, %v2069
  %2071 = vdwg.mxu0
  %v2072 = vmax.f32 %v1692, -20.0
  %v2073 = vmax.f32 %v1698, -20.0
  %v2074 = vmax.f32 %v1704, -20.0
  %v2075 = vmax.f32 %v1710, -20.0
  %v2076 = vmax.f32 %v1716, -20.0
  %v2077 = vmax.f32 %v1722, -20.0
  %v2078 = vmax.f32 %v1728, -20.0
  %v2079 = vmax.f32 %v1734, -20.0
  %v2080 = vmax.f32 %v1740, -20.0
  %v2081 = vmax.f32 %v1746, -20.0
  %v2082 = vmax.f32 %v1752, -20.0
  %v2083 = vmax.f32 %v1758, -20.0
  %v2084 = vmax.f32 %v1764, -20.0
  %v2085 = vmax.f32 %v1770, -20.0
  %v2086 = vmax.f32 %v1776, -20.0
  %v2087 = vmax.f32 %v1782, -20.0
  %v2088 = vmax.f32 %v1788, -20.0
  %v2089 = vmax.f32 %v1794, -20.0
  %v2090 = vmax.f32 %v1800, -20.0
  %v2091 = vmax.f32 %v1806, -20.0
  %v2092 = vmax.f32 %v1812, -20.0
  %v2093 = vmax.f32 %v1818, -20.0
  %v2094 = vmax.f32 %v1824, -20.0
  %v2095 = vmax.f32 %v1830, -20.0
  %v2096 = vmax.f32 %v1836, -20.0
  %v2097 = vmax.f32 %v1842, -20.0
  %v2098 = vmax.f32 %v1848, -20.0
  %v2099 = vmax.f32 %v1854, -20.0
  %v2100 = vmax.f32 %v1860, -20.0
  %v2101 = vmax.f32 %v1866, -20.0
  %v2102 = vmax.f32 %v1872, -20.0
  %v2103 = vmax.f32 %v1878, -20.0
  %v2104 = vmax.f32 %v1884, -20.0
  %v2105 = vmax.f32 %v1890, -20.0
  %v2106 = vmax.f32 %v1896, -20.0
  %v2107 = vmax.f32 %v1902, -20.0
  %v2108 = vmax.f32 %v1908, -20.0
  %v2109 = vmax.f32 %v1914, -20.0
  %v2110 = vmax.f32 %v1920, -20.0
  %v2111 = vmax.f32 %v1926, -20.0
  %v2112 = vmax.f32 %v1932, -20.0
  %v2113 = vmax.f32 %v1938, -20.0
  %v2114 = vmax.f32 %v1944, -20.0
  %v2115 = vmax.f32 %v1950, -20.0
  %v2116 = vmax.f32 %v1956, -20.0
  %v2117 = vmax.f32 %v1962, -20.0
  %v2118 = vmax.f32 %v1968, -20.0
  %v2119 = vmax.f32 %v1974, -20.0
  %v2120 = vmax.f32 %v1980, -20.0
  %v2121 = vmax.f32 %v1986, -20.0
  %v2122 = vmax.f32 %v1992, -20.0
  %v2123 = vmax.f32 %v1998, -20.0
  %v2124 = vmax.f32 %v2004, -20.0
  %v2125 = vmax.f32 %v2010, -20.0
  %v2126 = vmax.f32 %v2016, -20.0
  %v2127 = vmax.f32 %v2022, -20.0
  %v2128 = vmax.f32 %v2028, -20.0
  %v2129 = vmax.f32 %v2034, -20.0
  %v2130 = vmax.f32 %v2040, -20.0
  %v2131 = vmax.f32 %v2046, -20.0
  %v2132 = vmax.f32 %v2052, -20.0
  %v2133 = vmax.f32 %v2058, -20.0
  %v2134 = vmax.f32 %v2064, -20.0
  %v2135 = vmax.f32 %v2070, -20.0
  %v2136 = vmin.f32 %v2072, 2.0
  %v2137 = vmin.f32 %v2073, 2.0
  %v2138 = vmin.f32 %v2074, 2.0
  %v2139 = vmin.f32 %v2075, 2.0
  %v2140 = vmin.f32 %v2076, 2.0
  %v2141 = vmin.f32 %v2077, 2.0
  %v2142 = vmin.f32 %v2078, 2.0
  %v2143 = vmin.f32 %v2079, 2.0
  %v2144 = vmin.f32 %v2080, 2.0
  %v2145 = vmin.f32 %v2081, 2.0
  %v2146 = vmin.f32 %v2082, 2.0
  %v2147 = vmin.f32 %v2083, 2.0
  %v2148 = vmin.f32 %v2084, 2.0
  %v2149 = vmin.f32 %v2085, 2.0
  %v2150 = vmin.f32 %v2086, 2.0
  %v2151 = vmin.f32 %v2087, 2.0
  %v2152 = vmin.f32 %v2088, 2.0
  %v2153 = vmin.f32 %v2089, 2.0
  %v2154 = vmin.f32 %v2090, 2.0
  %v2155 = vmin.f32 %v2091, 2.0
  %v2156 = vmin.f32 %v2092, 2.0
  %v2157 = vmin.f32 %v2093, 2.0
  %v2158 = vmin.f32 %v2094, 2.0
  %v2159 = vmin.f32 %v2095, 2.0
  %v2160 = vmin.f32 %v2096, 2.0
  %v2161 = vmin.f32 %v2097, 2.0
  %v2162 = vmin.f32 %v2098, 2.0
  %v2163 = vmin.f32 %v2099, 2.0
  %v2164 = vmin.f32 %v2100, 2.0
  %v2165 = vmin.f32 %v2101, 2.0
  %v2166 = vmin.f32 %v2102, 2.0
  %v2167 = vmin.f32 %v2103, 2.0
  %v2168 = vmin.f32 %v2104, 2.0
  %v2169 = vmin.f32 %v2105, 2.0
  %v2170 = vmin.f32 %v2106, 2.0
  %v2171 = vmin.f32 %v2107, 2.0
  %v2172 = vmin.f32 %v2108, 2.0
  %v2173 = vmin.f32 %v2109, 2.0
  %v2174 = vmin.f32 %v2110, 2.0
  %v2175 = vmin.f32 %v2111, 2.0
  %v2176 = vmin.f32 %v2112, 2.0
  %v2177 = vmin.f32 %v2113, 2.0
  %v2178 = vmin.f32 %v2114, 2.0
  %v2179 = vmin.f32 %v2115, 2.0
  %v2180 = vmin.f32 %v2116, 2.0
  %v2181 = vmin.f32 %v2117, 2.0
  %v2182 = vmin.f32 %v2118, 2.0
  %v2183 = vmin.f32 %v2119, 2.0
  %v2184 = vmin.f32 %v2120, 2.0
  %v2185 = vmin.f32 %v2121, 2.0
  %v2186 = vmin.f32 %v2122, 2.0
  %v2187 = vmin.f32 %v2123, 2.0
  %v2188 = vmin.f32 %v2124, 2.0
  %v2189 = vmin.f32 %v2125, 2.0
  %v2190 = vmin.f32 %v2126, 2.0
  %v2191 = vmin.f32 %v2127, 2.0
  %v2192 = vmin.f32 %v2128, 2.0
  %v2193 = vmin.f32 %v2129, 2.0
  %v2194 = vmin.f32 %v2130, 2.0
  %v2195 = vmin.f32 %v2131, 2.0
  %v2196 = vmin.f32 %v2132, 2.0
  %v2197 = vmin.f32 %v2133, 2.0
  %v2198 = vmin.f32 %v2134, 2.0
  %v2199 = vmin.f32 %v2135, 2.0
  %v2200 = vmul.f32 %v2136, 1.442695
  %v2201 = vpow.pop %v2200
  %v2202 = vmul.f32 %v2137, 1.442695
  %v2203 = vpow.pop %v2202
  %v2204 = vmul.f32 %v2138, 1.442695
  %v2205 = vpow.pop %v2204
  %v2206 = vmul.f32 %v2139, 1.442695
  %v2207 = vpow.pop %v2206
  %v2208 = vmul.f32 %v2140, 1.442695
  %v2209 = vpow.pop %v2208
  %v2210 = vmul.f32 %v2141, 1.442695
  %v2211 = vpow.pop %v2210
  %v2212 = vmul.f32 %v2142, 1.442695
  %v2213 = vpow.pop %v2212
  %v2214 = vmul.f32 %v2143, 1.442695
  %v2215 = vpow.pop %v2214
  %v2216 = vmul.f32 %v2144, 1.442695
  %v2217 = vpow.pop %v2216
  %v2218 = vmul.f32 %v2145, 1.442695
  %v2219 = vpow.pop %v2218
  %v2220 = vmul.f32 %v2146, 1.442695
  %v2221 = vpow.pop %v2220
  %v2222 = vmul.f32 %v2147, 1.442695
  %v2223 = vpow.pop %v2222
  %v2224 = vmul.f32 %v2148, 1.442695
  %v2225 = vpow.pop %v2224
  %v2226 = vmul.f32 %v2149, 1.442695
  %v2227 = vpow.pop %v2226
  %v2228 = vmul.f32 %v2150, 1.442695
  %v2229 = vpow.pop %v2228
  %v2230 = vmul.f32 %v2151, 1.442695
  %v2231 = vpow.pop %v2230
  %v2232 = vmul.f32 %v2152, 1.442695
  %v2233 = vpow.pop %v2232
  %v2234 = vmul.f32 %v2153, 1.442695
  %v2235 = vpow.pop %v2234
  %v2236 = vmul.f32 %v2154, 1.442695
  %v2237 = vpow.pop %v2236
  %v2238 = vmul.f32 %v2155, 1.442695
  %v2239 = vpow.pop %v2238
  %v2240 = vmul.f32 %v2156, 1.442695
  %v2241 = vpow.pop %v2240
  %v2242 = vmul.f32 %v2157, 1.442695
  %v2243 = vpow.pop %v2242
  %v2244 = vmul.f32 %v2158, 1.442695
  %v2245 = vpow.pop %v2244
  %v2246 = vmul.f32 %v2159, 1.442695
  %v2247 = vpow.pop %v2246
  %v2248 = vmul.f32 %v2160, 1.442695
  %v2249 = vpow.pop %v2248
  %v2250 = vmul.f32 %v2161, 1.442695
  %v2251 = vpow.pop %v2250
  %v2252 = vmul.f32 %v2162, 1.442695
  %v2253 = vpow.pop %v2252
  %v2254 = vmul.f32 %v2163, 1.442695
  %v2255 = vpow.pop %v2254
  %v2256 = vmul.f32 %v2164, 1.442695
  %v2257 = vpow.pop %v2256
  %v2258 = vmul.f32 %v2165, 1.442695
  %v2259 = vpow.pop %v2258
  %v2260 = vmul.f32 %v2166, 1.442695
  %v2261 = vpow.pop %v2260
  %v2262 = vmul.f32 %v2167, 1.442695
  %v2263 = vpow.pop %v2262
  %v2264 = vmul.f32 %v2168, 1.442695
  %v2265 = vpow.pop %v2264
  %v2266 = vmul.f32 %v2169, 1.442695
  %v2267 = vpow.pop %v2266
  %v2268 = vmul.f32 %v2170, 1.442695
  %v2269 = vpow.pop %v2268
  %v2270 = vmul.f32 %v2171, 1.442695
  %v2271 = vpow.pop %v2270
  %v2272 = vmul.f32 %v2172, 1.442695
  %v2273 = vpow.pop %v2272
  %v2274 = vmul.f32 %v2173, 1.442695
  %v2275 = vpow.pop %v2274
  %v2276 = vmul.f32 %v2174, 1.442695
  %v2277 = vpow.pop %v2276
  %v2278 = vmul.f32 %v2175, 1.442695
  %v2279 = vpow.pop %v2278
  %v2280 = vmul.f32 %v2176, 1.442695
  %v2281 = vpow.pop %v2280
  %v2282 = vmul.f32 %v2177, 1.442695
  %v2283 = vpow.pop %v2282
  %v2284 = vmul.f32 %v2178, 1.442695
  %v2285 = vpow.pop %v2284
  %v2286 = vmul.f32 %v2179, 1.442695
  %v2287 = vpow.pop %v2286
  %v2288 = vmul.f32 %v2180, 1.442695
  %v2289 = vpow.pop %v2288
  %v2290 = vmul.f32 %v2181, 1.442695
  %v2291 = vpow.pop %v2290
  %v2292 = vmul.f32 %v2182, 1.442695
  %v2293 = vpow.pop %v2292
  %v2294 = vmul.f32 %v2183, 1.442695
  %v2295 = vpow.pop %v2294
  %v2296 = vmul.f32 %v2184, 1.442695
  %v2297 = vpow.pop %v2296
  %v2298 = vmul.f32 %v2185, 1.442695
  %v2299 = vpow.pop %v2298
  %v2300 = vmul.f32 %v2186, 1.442695
  %v2301 = vpow.pop %v2300
  %v2302 = vmul.f32 %v2187, 1.442695
  %v2303 = vpow.pop %v2302
  %v2304 = vmul.f32 %v2188, 1.442695
  %v2305 = vpow.pop %v2304
  %v2306 = vmul.f32 %v2189, 1.442695
  %v2307 = vpow.pop %v2306
  %v2308 = vmul.f32 %v2190, 1.442695
  %v2309 = vpow.pop %v2308
  %v2310 = vmul.f32 %v2191, 1.442695
  %v2311 = vpow.pop %v2310
  %v2312 = vmul.f32 %v2192, 1.442695
  %v2313 = vpow.pop %v2312
  %v2314 = vmul.f32 %v2193, 1.442695
  %v2315 = vpow.pop %v2314
  %v2316 = vmul.f32 %v2194, 1.442695
  %v2317 = vpow.pop %v2316
  %v2318 = vmul.f32 %v2195, 1.442695
  %v2319 = vpow.pop %v2318
  %v2320 = vmul.f32 %v2196, 1.442695
  %v2321 = vpow.pop %v2320
  %v2322 = vmul.f32 %v2197, 1.442695
  %v2323 = vpow.pop %v2322
  %v2324 = vmul.f32 %v2198, 1.442695
  %v2325 = vpow.pop %v2324
  %v2326 = vmul.f32 %v2199, 1.442695
  %v2327 = vpow.pop %v2326
  %v2328 = vld [vmem:[%s7] sm:$0xff]
  %v2329 = vld [vmem:[%s7 + $0x8] sm:$0xff]
  %v2330 = vld [vmem:[%s7 + $0x10] sm:$0xff]
  %v2331 = vld [vmem:[%s7 + $0x18] sm:$0xff]
  %v2332 = vld [vmem:[%s7 + $0x20] sm:$0xff]
  %v2333 = vld [vmem:[%s7 + $0x28] sm:$0xff]
  %v2334 = vld [vmem:[%s7 + $0x30] sm:$0xff]
  %v2335 = vld [vmem:[%s7 + $0x38] sm:$0xff]
  %v2336 = vld [vmem:[%s7 + $0x40] sm:$0xff]
  %v2337 = vld [vmem:[%s7 + $0x48] sm:$0xff]
  %v2338 = vld [vmem:[%s7 + $0x50] sm:$0xff]
  %v2339 = vld [vmem:[%s7 + $0x58] sm:$0xff]
  %v2340 = vld [vmem:[%s7 + $0x60] sm:$0xff]
  %v2341 = vld [vmem:[%s7 + $0x68] sm:$0xff]
  %v2342 = vld [vmem:[%s7 + $0x70] sm:$0xff]
  %v2343 = vld [vmem:[%s7 + $0x78] sm:$0xff]
  %v2344 = vld [vmem:[%s7 + $0x80] sm:$0xff]
  %v2345 = vld [vmem:[%s7 + $0x88] sm:$0xff]
  %v2346 = vld [vmem:[%s7 + $0x90] sm:$0xff]
  %v2347 = vld [vmem:[%s7 + $0x98] sm:$0xff]
  %v2348 = vld [vmem:[%s7 + $0xa0] sm:$0xff]
  %v2349 = vld [vmem:[%s7 + $0xa8] sm:$0xff]
  %v2350 = vld [vmem:[%s7 + $0xb0] sm:$0xff]
  %v2351 = vld [vmem:[%s7 + $0xb8] sm:$0xff]
  %v2352 = vld [vmem:[%s7 + $0xc0] sm:$0xff]
  %v2353 = vld [vmem:[%s7 + $0xc8] sm:$0xff]
  %v2354 = vld [vmem:[%s7 + $0xd0] sm:$0xff]
  %v2355 = vld [vmem:[%s7 + $0xd8] sm:$0xff]
  %v2356 = vld [vmem:[%s7 + $0xe0] sm:$0xff]
  %v2357 = vld [vmem:[%s7 + $0xe8] sm:$0xff]
  %v2358 = vld [vmem:[%s7 + $0xf0] sm:$0xff]
  %v2359 = vld [vmem:[%s7 + $0xf8] sm:$0xff]
  %v2360 = vld [vmem:[%s7 + $0x100] sm:$0xff]
  %v2361 = vld [vmem:[%s7 + $0x108] sm:$0xff]
  %v2362 = vld [vmem:[%s7 + $0x110] sm:$0xff]
  %v2363 = vld [vmem:[%s7 + $0x118] sm:$0xff]
  %v2364 = vld [vmem:[%s7 + $0x120] sm:$0xff]
  %v2365 = vld [vmem:[%s7 + $0x128] sm:$0xff]
  %v2366 = vld [vmem:[%s7 + $0x130] sm:$0xff]
  %v2367 = vld [vmem:[%s7 + $0x138] sm:$0xff]
  %v2368 = vld [vmem:[%s7 + $0x140] sm:$0xff]
  %v2369 = vld [vmem:[%s7 + $0x148] sm:$0xff]
  %v2370 = vld [vmem:[%s7 + $0x150] sm:$0xff]
  %v2371 = vld [vmem:[%s7 + $0x158] sm:$0xff]
  %v2372 = vld [vmem:[%s7 + $0x160] sm:$0xff]
  %v2373 = vld [vmem:[%s7 + $0x168] sm:$0xff]
  %v2374 = vld [vmem:[%s7 + $0x170] sm:$0xff]
  %v2375 = vld [vmem:[%s7 + $0x178] sm:$0xff]
  %v2376 = vld [vmem:[%s7 + $0x180] sm:$0xff]
  %v2377 = vld [vmem:[%s7 + $0x188] sm:$0xff]
  %v2378 = vld [vmem:[%s7 + $0x190] sm:$0xff]
  %v2379 = vld [vmem:[%s7 + $0x198] sm:$0xff]
  %v2380 = vld [vmem:[%s7 + $0x1a0] sm:$0xff]
  %v2381 = vld [vmem:[%s7 + $0x1a8] sm:$0xff]
  %v2382 = vld [vmem:[%s7 + $0x1b0] sm:$0xff]
  %v2383 = vld [vmem:[%s7 + $0x1b8] sm:$0xff]
  %v2384 = vld [vmem:[%s7 + $0x1c0] sm:$0xff]
  %v2385 = vld [vmem:[%s7 + $0x1c8] sm:$0xff]
  %v2386 = vld [vmem:[%s7 + $0x1d0] sm:$0xff]
  %v2387 = vld [vmem:[%s7 + $0x1d8] sm:$0xff]
  %v2388 = vld [vmem:[%s7 + $0x1e0] sm:$0xff]
  %v2389 = vld [vmem:[%s7 + $0x1e8] sm:$0xff]
  %v2390 = vld [vmem:[%s7 + $0x1f0] sm:$0xff]
  %v2391 = vld [vmem:[%s7 + $0x1f8] sm:$0xff]
  %v2392 = vmul.f32 %v2201, %v2328
  %v2393 = vmul.f32 %v2203, %v2329
  %v2394 = vmul.f32 %v2205, %v2330
  %v2395 = vmul.f32 %v2207, %v2331
  %v2396 = vmul.f32 %v2209, %v2332
  %v2397 = vmul.f32 %v2211, %v2333
  %v2398 = vmul.f32 %v2213, %v2334
  %v2399 = vmul.f32 %v2215, %v2335
  %v2400 = vmul.f32 %v2217, %v2336
  %v2401 = vmul.f32 %v2219, %v2337
  %v2402 = vmul.f32 %v2221, %v2338
  %v2403 = vmul.f32 %v2223, %v2339
  %v2404 = vmul.f32 %v2225, %v2340
  %v2405 = vmul.f32 %v2227, %v2341
  %v2406 = vmul.f32 %v2229, %v2342
  %v2407 = vmul.f32 %v2231, %v2343
  %v2408 = vmul.f32 %v2233, %v2344
  %v2409 = vmul.f32 %v2235, %v2345
  %v2410 = vmul.f32 %v2237, %v2346
  %v2411 = vmul.f32 %v2239, %v2347
  %v2412 = vmul.f32 %v2241, %v2348
  %v2413 = vmul.f32 %v2243, %v2349
  %v2414 = vmul.f32 %v2245, %v2350
  %v2415 = vmul.f32 %v2247, %v2351
  %v2416 = vmul.f32 %v2249, %v2352
  %v2417 = vmul.f32 %v2251, %v2353
  %v2418 = vmul.f32 %v2253, %v2354
  %v2419 = vmul.f32 %v2255, %v2355
  %v2420 = vmul.f32 %v2257, %v2356
  %v2421 = vmul.f32 %v2259, %v2357
  %v2422 = vmul.f32 %v2261, %v2358
  %v2423 = vmul.f32 %v2263, %v2359
  %v2424 = vmul.f32 %v2265, %v2360
  %v2425 = vmul.f32 %v2267, %v2361
  %v2426 = vmul.f32 %v2269, %v2362
  %v2427 = vmul.f32 %v2271, %v2363
  %v2428 = vmul.f32 %v2273, %v2364
  %v2429 = vmul.f32 %v2275, %v2365
  %v2430 = vmul.f32 %v2277, %v2366
  %v2431 = vmul.f32 %v2279, %v2367
  %v2432 = vmul.f32 %v2281, %v2368
  %v2433 = vmul.f32 %v2283, %v2369
  %v2434 = vmul.f32 %v2285, %v2370
  %v2435 = vmul.f32 %v2287, %v2371
  %v2436 = vmul.f32 %v2289, %v2372
  %v2437 = vmul.f32 %v2291, %v2373
  %v2438 = vmul.f32 %v2293, %v2374
  %v2439 = vmul.f32 %v2295, %v2375
  %v2440 = vmul.f32 %v2297, %v2376
  %v2441 = vmul.f32 %v2299, %v2377
  %v2442 = vmul.f32 %v2301, %v2378
  %v2443 = vmul.f32 %v2303, %v2379
  %v2444 = vmul.f32 %v2305, %v2380
  %v2445 = vmul.f32 %v2307, %v2381
  %v2446 = vmul.f32 %v2309, %v2382
  %v2447 = vmul.f32 %v2311, %v2383
  %v2448 = vmul.f32 %v2313, %v2384
  %v2449 = vmul.f32 %v2315, %v2385
  %v2450 = vmul.f32 %v2317, %v2386
  %v2451 = vmul.f32 %v2319, %v2387
  %v2452 = vmul.f32 %v2321, %v2388
  %v2453 = vmul.f32 %v2323, %v2389
  %v2454 = vmul.f32 %v2325, %v2390
  %v2455 = vmul.f32 %v2327, %v2391
  %v2456 = vadd.f32 %v1690, %v2392
  %v2457 = vadd.f32 %v1696, %v2393
  %v2458 = vadd.f32 %v1702, %v2394
  %v2459 = vadd.f32 %v1708, %v2395
  %v2460 = vadd.f32 %v1714, %v2396
  %v2461 = vadd.f32 %v1720, %v2397
  %v2462 = vadd.f32 %v1726, %v2398
  %v2463 = vadd.f32 %v1732, %v2399
  %v2464 = vadd.f32 %v1738, %v2400
  %v2465 = vadd.f32 %v1744, %v2401
  %v2466 = vadd.f32 %v1750, %v2402
  %v2467 = vadd.f32 %v1756, %v2403
  %v2468 = vadd.f32 %v1762, %v2404
  %v2469 = vadd.f32 %v1768, %v2405
  %v2470 = vadd.f32 %v1774, %v2406
  %v2471 = vadd.f32 %v1780, %v2407
  %v2472 = vadd.f32 %v1786, %v2408
  %v2473 = vadd.f32 %v1792, %v2409
  %v2474 = vadd.f32 %v1798, %v2410
  %v2475 = vadd.f32 %v1804, %v2411
  %v2476 = vadd.f32 %v1810, %v2412
  %v2477 = vadd.f32 %v1816, %v2413
  %v2478 = vadd.f32 %v1822, %v2414
  %v2479 = vadd.f32 %v1828, %v2415
  %v2480 = vadd.f32 %v1834, %v2416
  %v2481 = vadd.f32 %v1840, %v2417
  %v2482 = vadd.f32 %v1846, %v2418
  %v2483 = vadd.f32 %v1852, %v2419
  %v2484 = vadd.f32 %v1858, %v2420
  %v2485 = vadd.f32 %v1864, %v2421
  %v2486 = vadd.f32 %v1870, %v2422
  %v2487 = vadd.f32 %v1876, %v2423
  %v2488 = vadd.f32 %v1882, %v2424
  %v2489 = vadd.f32 %v1888, %v2425
  %v2490 = vadd.f32 %v1894, %v2426
  %v2491 = vadd.f32 %v1900, %v2427
  %v2492 = vadd.f32 %v1906, %v2428
  %v2493 = vadd.f32 %v1912, %v2429
  %v2494 = vadd.f32 %v1918, %v2430
  %v2495 = vadd.f32 %v1924, %v2431
  %v2496 = vadd.f32 %v1930, %v2432
  %v2497 = vadd.f32 %v1936, %v2433
  %v2498 = vadd.f32 %v1942, %v2434
  %v2499 = vadd.f32 %v1948, %v2435
  %v2500 = vadd.f32 %v1954, %v2436
  %v2501 = vadd.f32 %v1960, %v2437
  %v2502 = vadd.f32 %v1966, %v2438
  %v2503 = vadd.f32 %v1972, %v2439
  %v2504 = vadd.f32 %v1978, %v2440
  %v2505 = vadd.f32 %v1984, %v2441
  %v2506 = vadd.f32 %v1990, %v2442
  %v2507 = vadd.f32 %v1996, %v2443
  %v2508 = vadd.f32 %v2002, %v2444
  %v2509 = vadd.f32 %v2008, %v2445
  %v2510 = vadd.f32 %v2014, %v2446
  %v2511 = vadd.f32 %v2020, %v2447
  %v2512 = vadd.f32 %v2026, %v2448
  %v2513 = vadd.f32 %v2032, %v2449
  %v2514 = vadd.f32 %v2038, %v2450
  %v2515 = vadd.f32 %v2044, %v2451
  %v2516 = vadd.f32 %v2050, %v2452
  %v2517 = vadd.f32 %v2056, %v2453
  %v2518 = vadd.f32 %v2062, %v2454
  %v2519 = vadd.f32 %v2068, %v2455
  %v2520 = vtanh.pop %v2456
  %v2521 = vtanh.pop %v2457
  %v2522 = vtanh.pop %v2458
  %v2523 = vtanh.pop %v2459
  %v2524 = vtanh.pop %v2460
  %v2525 = vtanh.pop %v2461
  %v2526 = vtanh.pop %v2462
  %v2527 = vtanh.pop %v2463
  %v2528 = vtanh.pop %v2464
  %v2529 = vtanh.pop %v2465
  %v2530 = vtanh.pop %v2466
  %v2531 = vtanh.pop %v2467
  %v2532 = vtanh.pop %v2468
  %v2533 = vtanh.pop %v2469
  %v2534 = vtanh.pop %v2470
  %v2535 = vtanh.pop %v2471
  %v2536 = vtanh.pop %v2472
  %v2537 = vtanh.pop %v2473
  %v2538 = vtanh.pop %v2474
  %v2539 = vtanh.pop %v2475
  %v2540 = vtanh.pop %v2476
  %v2541 = vtanh.pop %v2477
  %v2542 = vtanh.pop %v2478
  %v2543 = vtanh.pop %v2479
  %v2544 = vtanh.pop %v2480
  %v2545 = vtanh.pop %v2481
  %v2546 = vtanh.pop %v2482
  %v2547 = vtanh.pop %v2483
  %v2548 = vtanh.pop %v2484
  %v2549 = vtanh.pop %v2485
  %v2550 = vtanh.pop %v2486
  %v2551 = vtanh.pop %v2487
  %v2552 = vtanh.pop %v2488
  %v2553 = vtanh.pop %v2489
  %v2554 = vtanh.pop %v2490
  %v2555 = vtanh.pop %v2491
  %v2556 = vtanh.pop %v2492
  %v2557 = vtanh.pop %v2493
  %v2558 = vtanh.pop %v2494
  %v2559 = vtanh.pop %v2495
  %v2560 = vtanh.pop %v2496
  %v2561 = vtanh.pop %v2497
  %v2562 = vtanh.pop %v2498
  %v2563 = vtanh.pop %v2499
  %v2564 = vtanh.pop %v2500
  %v2565 = vtanh.pop %v2501
  %v2566 = vtanh.pop %v2502
  %v2567 = vtanh.pop %v2503
  %v2568 = vtanh.pop %v2504
  %v2569 = vtanh.pop %v2505
  %v2570 = vtanh.pop %v2506
  %v2571 = vtanh.pop %v2507
  %v2572 = vtanh.pop %v2508
  %v2573 = vtanh.pop %v2509
  %v2574 = vtanh.pop %v2510
  %v2575 = vtanh.pop %v2511
  %v2576 = vtanh.pop %v2512
  %v2577 = vtanh.pop %v2513
  %v2578 = vtanh.pop %v2514
  %v2579 = vtanh.pop %v2515
  %v2580 = vtanh.pop %v2516
  %v2581 = vtanh.pop %v2517
  %v2582 = vtanh.pop %v2518
  %v2583 = vtanh.pop %v2519
  %2584 = vst [vmem:[%s8] sm:$0xff] %v2520
  %2585 = vst [vmem:[%s8 + $0x8] sm:$0xff] %v2521
  %2586 = vst [vmem:[%s8 + $0x10] sm:$0xff] %v2522
  %2587 = vst [vmem:[%s8 + $0x18] sm:$0xff] %v2523
  %2588 = vst [vmem:[%s8 + $0x20] sm:$0xff] %v2524
  %2589 = vst [vmem:[%s8 + $0x28] sm:$0xff] %v2525
  %2590 = vst [vmem:[%s8 + $0x30] sm:$0xff] %v2526
  %2591 = vst [vmem:[%s8 + $0x38] sm:$0xff] %v2527
  %2592 = vst [vmem:[%s8 + $0x40] sm:$0xff] %v2528
  %2593 = vst [vmem:[%s8 + $0x48] sm:$0xff] %v2529
  %2594 = vst [vmem:[%s8 + $0x50] sm:$0xff] %v2530
  %2595 = vst [vmem:[%s8 + $0x58] sm:$0xff] %v2531
  %2596 = vst [vmem:[%s8 + $0x60] sm:$0xff] %v2532
  %2597 = vst [vmem:[%s8 + $0x68] sm:$0xff] %v2533
  %2598 = vst [vmem:[%s8 + $0x70] sm:$0xff] %v2534
  %2599 = vst [vmem:[%s8 + $0x78] sm:$0xff] %v2535
  %2600 = vst [vmem:[%s8 + $0x80] sm:$0xff] %v2536
  %2601 = vst [vmem:[%s8 + $0x88] sm:$0xff] %v2537
  %2602 = vst [vmem:[%s8 + $0x90] sm:$0xff] %v2538
  %2603 = vst [vmem:[%s8 + $0x98] sm:$0xff] %v2539
  %2604 = vst [vmem:[%s8 + $0xa0] sm:$0xff] %v2540
  %2605 = vst [vmem:[%s8 + $0xa8] sm:$0xff] %v2541
  %2606 = vst [vmem:[%s8 + $0xb0] sm:$0xff] %v2542
  %2607 = vst [vmem:[%s8 + $0xb8] sm:$0xff] %v2543
  %2608 = vst [vmem:[%s8 + $0xc0] sm:$0xff] %v2544
  %2609 = vst [vmem:[%s8 + $0xc8] sm:$0xff] %v2545
  %2610 = vst [vmem:[%s8 + $0xd0] sm:$0xff] %v2546
  %2611 = vst [vmem:[%s8 + $0xd8] sm:$0xff] %v2547
  %2612 = vst [vmem:[%s8 + $0xe0] sm:$0xff] %v2548
  %2613 = vst [vmem:[%s8 + $0xe8] sm:$0xff] %v2549
  %2614 = vst [vmem:[%s8 + $0xf0] sm:$0xff] %v2550
  %2615 = vst [vmem:[%s8 + $0xf8] sm:$0xff] %v2551
  %2616 = vst [vmem:[%s8 + $0x100] sm:$0xff] %v2552
  %2617 = vst [vmem:[%s8 + $0x108] sm:$0xff] %v2553
  %2618 = vst [vmem:[%s8 + $0x110] sm:$0xff] %v2554
  %2619 = vst [vmem:[%s8 + $0x118] sm:$0xff] %v2555
  %2620 = vst [vmem:[%s8 + $0x120] sm:$0xff] %v2556
  %2621 = vst [vmem:[%s8 + $0x128] sm:$0xff] %v2557
  %2622 = vst [vmem:[%s8 + $0x130] sm:$0xff] %v2558
  %2623 = vst [vmem:[%s8 + $0x138] sm:$0xff] %v2559
  %2624 = vst [vmem:[%s8 + $0x140] sm:$0xff] %v2560
  %2625 = vst [vmem:[%s8 + $0x148] sm:$0xff] %v2561
  %2626 = vst [vmem:[%s8 + $0x150] sm:$0xff] %v2562
  %2627 = vst [vmem:[%s8 + $0x158] sm:$0xff] %v2563
  %2628 = vst [vmem:[%s8 + $0x160] sm:$0xff] %v2564
  %2629 = vst [vmem:[%s8 + $0x168] sm:$0xff] %v2565
  %2630 = vst [vmem:[%s8 + $0x170] sm:$0xff] %v2566
  %2631 = vst [vmem:[%s8 + $0x178] sm:$0xff] %v2567
  %2632 = vst [vmem:[%s8 + $0x180] sm:$0xff] %v2568
  %2633 = vst [vmem:[%s8 + $0x188] sm:$0xff] %v2569
  %2634 = vst [vmem:[%s8 + $0x190] sm:$0xff] %v2570
  %2635 = vst [vmem:[%s8 + $0x198] sm:$0xff] %v2571
  %2636 = vst [vmem:[%s8 + $0x1a0] sm:$0xff] %v2572
  %2637 = vst [vmem:[%s8 + $0x1a8] sm:$0xff] %v2573
  %2638 = vst [vmem:[%s8 + $0x1b0] sm:$0xff] %v2574
  %2639 = vst [vmem:[%s8 + $0x1b8] sm:$0xff] %v2575
  %2640 = vst [vmem:[%s8 + $0x1c0] sm:$0xff] %v2576
  %2641 = vst [vmem:[%s8 + $0x1c8] sm:$0xff] %v2577
  %2642 = vst [vmem:[%s8 + $0x1d0] sm:$0xff] %v2578
  %2643 = vst [vmem:[%s8 + $0x1d8] sm:$0xff] %v2579
  %2644 = vst [vmem:[%s8 + $0x1e0] sm:$0xff] %v2580
  %2645 = vst [vmem:[%s8 + $0x1e8] sm:$0xff] %v2581
  %2646 = vst [vmem:[%s8 + $0x1f0] sm:$0xff] %v2582
  %2647 = vst [vmem:[%s8 + $0x1f8] sm:$0xff] %v2583
  // Predicated region
  $region34: #{_actor_sac_jit.1} parent=0 // pred_check
    _
  $region35: #{_actor_sac_jit.1} parent=0 // pred_check_branch
    %2649 = sbr.rel (0) target = $region37
  $region36: #{_actor_sac_jit.1} parent=0 // pred_region
    _
  $region37: #{_actor_sac_jit.1} parent=0 // pred_fallthru
    _
  // Predicated region
  $region38: #{_actor_sac_jit.1} parent=0 // pred_check
    _
  $region39: #{_actor_sac_jit.1} parent=0 // pred_check_branch
    %2651 = sbr.rel (0) target = $region41
  $region40: #{_actor_sac_jit.1} parent=0 // pred_region
    _
  $region41: #{_actor_sac_jit.1} parent=0 // pred_fallthru
    _

</llo_original>
